<compile_context>
chip_gen: v7x
topology: tpu7x:2x2x1
jax: 0.10.0
libtpu: 0.0.40
codegen_flags: <defaults>
</compile_context>

<pallas_src>
import jax
import jax.numpy as jnp
from jax import lax
from jax.experimental import pallas as pl
from jax.experimental.pallas import tpu as pltpu


def _lstm_max_kernel(gx_ref, mask_ref, whh_ref, out_ref, h_scr, c_scr):
    """One LSTM direction: T-step recurrence + masked running max over time.

    gx_ref   : (T, B, 4H) f32  precomputed x_t @ W_ih (gate cols ordered i|f|o|g)
    mask_ref : (T, B, 1)  f32  additive mask: 0.0 where t < len_b else -inf
    whh_ref  : (H, 4H)    f32  fused hidden->gate weights (same column order)
    out_ref  : (B, H)     f32  max over valid t of h_t
    h_scr, c_scr : (B, H) f32  recurrent-state scratch
    """
    T = gx_ref.shape[0]
    H = out_ref.shape[-1]

    h_scr[...] = jnp.zeros_like(h_scr)
    c_scr[...] = jnp.zeros_like(c_scr)
    out_ref[...] = jnp.full_like(out_ref, -jnp.inf)

    w_hh = whh_ref[...]                                   # hoisted out of the loop

    def body(t, carry):
        h = h_scr[...]
        # single lane-dense (B, 4H) MXU matmul per step (only the h-dependent half)
        gates = gx_ref[t] + jnp.dot(h, w_hh, preferred_element_type=jnp.float32)
        sfo = jax.nn.sigmoid(gates[:, : 3 * H])           # i | f | o in one EUP slab
        g_g = jnp.tanh(gates[:, 3 * H:])
        i_g = sfo[:, :H]
        f_g = sfo[:, H: 2 * H]
        o_g = sfo[:, 2 * H:]
        c_new = f_g * c_scr[...] + i_g * g_g
        h_new = o_g * jnp.tanh(c_new)
        c_scr[...] = c_new
        h_scr[...] = h_new
        out_ref[...] = jnp.maximum(out_ref[...], h_new + mask_ref[t])
        return carry

    # T is small and static: fully unroll for cross-step LLO scheduling visibility.
    lax.fori_loop(0, T, body, 0, unroll=True)


def lstm_max_pallas(gates_x, mask, w_hh):
    """gates_x: (2, T, B, 4H); mask: (T, B, 1); w_hh: (2, H, 4H)  ->  (2, B, H)."""
    nd, T, B, G = gates_x.shape
    H = w_hh.shape[1]
    return pl.pallas_call(
        _lstm_max_kernel,
        out_shape=jax.ShapeDtypeStruct((nd, B, H), jnp.float32),
        grid=(nd,),
        in_specs=[
            pl.BlockSpec((None, T, B, G), lambda d: (d, 0, 0, 0)),  # per-direction
            pl.BlockSpec((T, B, 1), lambda d: (0, 0, 0)),           # shared mask
            pl.BlockSpec((None, H, G), lambda d: (d, 0, 0)),        # per-direction
        ],
        out_specs=pl.BlockSpec((None, B, H), lambda d: (d, 0, 0)),
        scratch_shapes=[
            pltpu.VMEM((B, H), jnp.float32),   # h state
            pltpu.VMEM((B, H), jnp.float32),   # c state
        ],
        compiler_params=pltpu.CompilerParams(
            dimension_semantics=("parallel",)),   # direction axis -> own TC on v7x
    )(gates_x, mask, w_hh)


def _fuse_gates(w4):
    """(4, In, H) per-gate weights in torch order (i, f, g, o) -> (In, 4H), cols i|f|o|g."""
    d_in, H = w4.shape[1], w4.shape[2]
    return jnp.stack([w4[0], w4[1], w4[3], w4[2]], axis=1).reshape(d_in, 4 * H)


def bilstm_forward(params, text, text_length):
    """text: (B, T) int32 tokens; text_length: (B,) int32  ->  (B, 2H, 1, 1)."""
    emb = jnp.take(params["embed"], text, axis=0)                # (B, T, D)
    x_tm = jnp.transpose(emb, (1, 0, 2)).astype(jnp.float32)     # (T, B, D)
    T, B, _ = x_tm.shape

    wih = jnp.stack([_fuse_gates(params["w_ih_0"]),
                     _fuse_gates(params["w_ih_1"])], axis=0)     # (2, D, 4H)
    whh = jnp.stack([_fuse_gates(params["w_hh_0"]),
                     _fuse_gates(params["w_hh_1"])], axis=0)     # (2, H, 4H)
    H = whh.shape[1]

    # hoisted input projection: one big matmul per direction, off the serial path
    gates_x = jnp.einsum("tbd,edg->etbg", x_tm, wih)             # (2, T, B, 4H)

    lens = text_length.astype(jnp.int32)                         # (B,)
    mask = jnp.where(jnp.arange(T)[:, None] < lens[None, :],
                     0.0, -jnp.inf).astype(jnp.float32)[:, :, None]  # (T, B, 1)

    m = lstm_max_pallas(gates_x, mask, whh)                      # (2, B, H)

    # torch pad_packed_sequence zero-pads rows len_b <= t < max(len); the time-max
    # therefore also sees 0 for those rows.  Restore with a single select.
    lmax = jnp.max(lens)
    m = jnp.where(lens[None, :, None] < lmax, jnp.maximum(m, 0.0), m)

    out = jnp.transpose(m, (1, 0, 2)).reshape(B, 2 * H)          # concat fwd | "rev"
    return out[:, :, None, None]                                 # (B, 2H, 1, 1)


# ----------------------------- pure-JAX reference -----------------------------
def _lstm_max_ref(x_tm, lengths, w_ih, w_hh):
    T, B, _ = x_tm.shape
    H = w_hh.shape[-1]
    lmax = jnp.max(lengths)

    def step(carry, inp):
        h, c, m = carry
        x_t, t = inp
        gi = x_t @ w_ih[0] + h @ w_hh[0]
        gf = x_t @ w_ih[1] + h @ w_hh[1]
        gg = x_t @ w_ih[2] + h @ w_hh[2]
        go = x_t @ w_ih[3] + h @ w_hh[3]
        c = jax.nn.sigmoid(gf) * c + jax.nn.sigmoid(gi) * jnp.tanh(gg)
        h = jax.nn.sigmoid(go) * jnp.tanh(c)
        valid = t < lengths.reshape(-1, 1)
        pad_val = jnp.where(t < lmax, 0.0, -jnp.inf)
        m = jnp.maximum(m, jnp.where(valid, h, pad_val))
        return (h, c, m), None

    init = (jnp.zeros((B, H), jnp.float32),
            jnp.zeros((B, H), jnp.float32),
            jnp.full((B, H), -jnp.inf, jnp.float32))
    (h, c, m), _ = lax.scan(step, init, (x_tm, jnp.arange(T)))
    return m


if __name__ == "__main__":
    # args: vocab_size=20, embedding_size=16, num_lstm_units=32, bidirectional=True
    B, T, V, D, H = 2, 8, 20, 16, 32

    key = jax.random.PRNGKey(0)
    k_emb, k_ih0, k_hh0, k_ih1, k_hh1, k_txt = jax.random.split(key, 6)

    embed = jax.random.normal(k_emb, (V, D), jnp.float32)
    embed = embed.at[0].set(0.0)                 # padding_idx=0

    bound = 1.0 / (H ** 0.5)                     # PyTorch LSTM default init range
    w_ih_0 = jax.random.uniform(k_ih0, (4, D, H), jnp.float32, -bound, bound)
    w_hh_0 = jax.random.uniform(k_hh0, (4, H, H), jnp.float32, -bound, bound)
    w_ih_1 = jax.random.uniform(k_ih1, (4, D, H), jnp.float32, -bound, bound)
    w_hh_1 = jax.random.uniform(k_hh1, (4, H, H), jnp.float32, -bound, bound)

    params = dict(embed=embed, w_ih_0=w_ih_0, w_hh_0=w_hh_0,
                  w_ih_1=w_ih_1, w_hh_1=w_hh_1)

    text_length = jnp.array([8, 5], jnp.int32)
    text = jax.random.randint(k_txt, (B, T), 1, V, dtype=jnp.int32)
    tmask = jnp.arange(T)[None, :] < text_length[:, None]
    text = jnp.where(tmask, text, 0).astype(jnp.int32)   # pad with token 0

    out = jax.jit(bilstm_forward)(params, text, text_length)
    out = jax.block_until_ready(out)
    assert out.shape == (B, 2 * H, 1, 1), out.shape

    # correctness check against pure-JAX reference (per-gate, non-fused layout)
    emb = jnp.take(embed, text, axis=0)
    x_tm = jnp.transpose(emb, (1, 0, 2))
    ref = jnp.concatenate([_lstm_max_ref(x_tm, text_length, w_ih_0, w_hh_0),
                           _lstm_max_ref(x_tm, text_length, w_ih_1, w_hh_1)],
                          axis=-1)[:, :, None, None]
    err = jnp.max(jnp.abs(out - ref))
    assert jnp.allclose(out, ref, atol=1e-3, rtol=1e-3), f"mismatch vs reference: {err}"

    print("KERNEL_OK")
</pallas_src>

<mosaic_0001>
module attributes {stable_mosaic.version = 11 : i64} {
  func.func @_lstm_max_kernel(%arg0: i32, %arg1: memref<1x8x2x128xf32, #tpu.memory_space<vmem>>, %arg2: memref<8x2x1xf32, #tpu.memory_space<vmem>>, %arg3: memref<1x32x128xf32, #tpu.memory_space<vmem>>, %arg4: memref<1x2x32xf32, #tpu.memory_space<vmem>>, %arg5: memref<2x32xf32, #tpu.memory_space<vmem>>, %arg6: memref<2x32xf32, #tpu.memory_space<vmem>>) attributes {dimension_semantics = [#tpu.dimension_semantics<parallel>], iteration_bounds = array<i64: 2>, scalar_prefetch = 0 : i64, scratch_operands = 2 : i64, tpu.core_type = #tpu.core_type<tc>, window_params = [{transform_indices = @transform_0, window_bounds = array<i64: 1, 8, 2, 128>}, {pipeline_mode = #tpu.pipeline_mode<synchronous>, transform_indices = @transform_1, window_bounds = array<i64: 8, 2, 1>}, {transform_indices = @transform_2, window_bounds = array<i64: 1, 32, 128>}, {transform_indices = @transform_3, window_bounds = array<i64: 1, 2, 32>}]} {
    %cst = arith.constant 0.000000e+00 : f32
    %0 = vector.broadcast %cst : f32 to vector<2x32xf32>
    %c0 = arith.constant 0 : index
    %c0_0 = arith.constant 0 : index
    %1 = vector.load %arg5[%c0, %c0_0] : memref<2x32xf32, #tpu.memory_space<vmem>>, vector<2x32xf32>
    tpu.vector_store %arg5[%c0, %c0_0], %0 {strides = array<i32>} : memref<2x32xf32, #tpu.memory_space<vmem>>, vector<2x32xf32>,
    %cst_1 = arith.constant 0.000000e+00 : f32
    %2 = vector.broadcast %cst_1 : f32 to vector<2x32xf32>
    %c0_2 = arith.constant 0 : index
    %c0_3 = arith.constant 0 : index
    %3 = vector.load %arg6[%c0_2, %c0_3] : memref<2x32xf32, #tpu.memory_space<vmem>>, vector<2x32xf32>
    tpu.vector_store %arg6[%c0_2, %c0_3], %2 {strides = array<i32>} : memref<2x32xf32, #tpu.memory_space<vmem>>, vector<2x32xf32>,
    %cst_4 = arith.constant 0xFF800000 : f32
    %4 = vector.broadcast %cst_4 : f32 to vector<2x32xf32>
    %c0_5 = arith.constant 0 : index
    %c0_6 = arith.constant 0 : index
    %c0_7 = arith.constant 0 : index
    %5 = vector.load %arg4[%c0_5, %c0_6, %c0_7] : memref<1x2x32xf32, #tpu.memory_space<vmem>>, vector<1x2x32xf32>
    %6 = vector.shape_cast %5 : vector<1x2x32xf32> to vector<2x32xf32>
    %7 = vector.shape_cast %4 : vector<2x32xf32> to vector<1x2x32xf32>
    tpu.vector_store %arg4[%c0_5, %c0_6, %c0_7], %7 {strides = array<i32>} : memref<1x2x32xf32, #tpu.memory_space<vmem>>, vector<1x2x32xf32>,
    %c0_8 = arith.constant 0 : index
    %c0_9 = arith.constant 0 : index
    %c0_10 = arith.constant 0 : index
    %8 = vector.load %arg3[%c0_8, %c0_9, %c0_10] : memref<1x32x128xf32, #tpu.memory_space<vmem>>, vector<1x32x128xf32>
    %9 = vector.shape_cast %8 : vector<1x32x128xf32> to vector<32x128xf32>
    %c0_i32 = arith.constant 0 : i32
    %c0_11 = arith.constant 0 : index
    %c0_12 = arith.constant 0 : index
    %10 = vector.load %arg5[%c0_11, %c0_12] : memref<2x32xf32, #tpu.memory_space<vmem>>, vector<2x32xf32>
    %c0_13 = arith.constant 0 : index
    %11 = arith.index_cast %c0_i32 : i32 to index
    %c0_14 = arith.constant 0 : index
    %c0_15 = arith.constant 0 : index
    %12 = vector.load %arg1[%c0_13, %11, %c0_14, %c0_15] : memref<1x8x2x128xf32, #tpu.memory_space<vmem>>, vector<1x1x2x128xf32>
    %13 = vector.shape_cast %12 : vector<1x1x2x128xf32> to vector<2x128xf32>
    %cst_16 = arith.constant dense<0.000000e+00> : vector<2x128xf32>
    %14 = tpu.matmul %10, %9, %cst_16 {dimension_numbers = #tpu.dot_dimension_numbers<[1], [0], [0], [1], [0, 0, 1, 1], [], []>} : vector<2x32xf32>, vector<32x128xf32>, vector<2x128xf32> -> vector<2x128xf32>
    %15 = arith.addf %13, %14 : vector<2x128xf32>
    %16 = vector.extract_strided_slice %15 {offsets = [0, 0], sizes = [2, 96], strides = [1, 1]} : vector<2x128xf32> to vector<2x96xf32>
    %17 = arith.negf %16 : vector<2x96xf32>
    %18 = math.exp %17 : vector<2x96xf32>
    %cst_17 = arith.constant 1.000000e+00 : f32
    %19 = vector.broadcast %cst_17 : f32 to vector<2x96xf32>
    %20 = arith.addf %19, %18 : vector<2x96xf32>
    %21 = arith.divf %19, %20 : vector<2x96xf32>
    %22 = vector.extract_strided_slice %15 {offsets = [0, 96], sizes = [2, 32], strides = [1, 1]} : vector<2x128xf32> to vector<2x32xf32>
    %23 = math.tanh %22 : vector<2x32xf32>
    %24 = vector.extract_strided_slice %21 {offsets = [0, 0], sizes = [2, 32], strides = [1, 1]} : vector<2x96xf32> to vector<2x32xf32>
    %25 = vector.extract_strided_slice %21 {offsets = [0, 32], sizes = [2, 32], strides = [1, 1]} : vector<2x96xf32> to vector<2x32xf32>
    %26 = vector.extract_strided_slice %21 {offsets = [0, 64], sizes = [2, 32], strides = [1, 1]} : vector<2x96xf32> to vector<2x32xf32>
    %c0_18 = arith.constant 0 : index
    %c0_19 = arith.constant 0 : index
    %27 = vector.load %arg6[%c0_18, %c0_19] : memref<2x32xf32, #tpu.memory_space<vmem>>, vector<2x32xf32>
    %28 = arith.mulf %25, %27 : vector<2x32xf32>
    %29 = arith.mulf %24, %23 : vector<2x32xf32>
    %30 = arith.addf %28, %29 : vector<2x32xf32>
    %31 = math.tanh %30 : vector<2x32xf32>
    %32 = arith.mulf %26, %31 : vector<2x32xf32>
    %c0_20 = arith.constant 0 : index
    %c0_21 = arith.constant 0 : index
    %33 = vector.load %arg6[%c0_20, %c0_21] : memref<2x32xf32, #tpu.memory_space<vmem>>, vector<2x32xf32>
    tpu.vector_store %arg6[%c0_20, %c0_21], %30 {strides = array<i32>} : memref<2x32xf32, #tpu.memory_space<vmem>>, vector<2x32xf32>,
    %c0_22 = arith.constant 0 : index
    %c0_23 = arith.constant 0 : index
    %34 = vector.load %arg5[%c0_22, %c0_23] : memref<2x32xf32, #tpu.memory_space<vmem>>, vector<2x32xf32>
    tpu.vector_store %arg5[%c0_22, %c0_23], %32 {strides = array<i32>} : memref<2x32xf32, #tpu.memory_space<vmem>>, vector<2x32xf32>,
    %c0_24 = arith.constant 0 : index
    %c0_25 = arith.constant 0 : index
    %c0_26 = arith.constant 0 : index
    %35 = vector.load %arg4[%c0_24, %c0_25, %c0_26] : memref<1x2x32xf32, #tpu.memory_space<vmem>>, vector<1x2x32xf32>
    %36 = vector.shape_cast %35 : vector<1x2x32xf32> to vector<2x32xf32>
    %37 = arith.index_cast %c0_i32 : i32 to index
    %c0_27 = arith.constant 0 : index
    %c0_28 = arith.constant 0 : index
    %38 = vector.load %arg2[%37, %c0_27, %c0_28] : memref<8x2x1xf32, #tpu.memory_space<vmem>>, vector<1x2x1xf32>
    %39 = vector.shape_cast %38 : vector<1x2x1xf32> to vector<2x1xf32>
    %40 = vector.broadcast %39 : vector<2x1xf32> to vector<2x32xf32>
    %41 = arith.addf %32, %40 : vector<2x32xf32>
    %42 = arith.maximumf %36, %41 : vector<2x32xf32>
    %c0_29 = arith.constant 0 : index
    %c0_30 = arith.constant 0 : index
    %c0_31 = arith.constant 0 : index
    %43 = vector.load %arg4[%c0_29, %c0_30, %c0_31] : memref<1x2x32xf32, #tpu.memory_space<vmem>>, vector<1x2x32xf32>
    %44 = vector.shape_cast %43 : vector<1x2x32xf32> to vector<2x32xf32>
    %45 = vector.shape_cast %42 : vector<2x32xf32> to vector<1x2x32xf32>
    tpu.vector_store %arg4[%c0_29, %c0_30, %c0_31], %45 {strides = array<i32>} : memref<1x2x32xf32, #tpu.memory_space<vmem>>, vector<1x2x32xf32>,
    %c1_i32 = arith.constant 1 : i32
    %c0_32 = arith.constant 0 : index
    %c0_33 = arith.constant 0 : index
    %46 = vector.load %arg5[%c0_32, %c0_33] : memref<2x32xf32, #tpu.memory_space<vmem>>, vector<2x32xf32>
    %c0_34 = arith.constant 0 : index
    %47 = arith.index_cast %c1_i32 : i32 to index
    %c0_35 = arith.constant 0 : index
    %c0_36 = arith.constant 0 : index
    %48 = vector.load %arg1[%c0_34, %47, %c0_35, %c0_36] : memref<1x8x2x128xf32, #tpu.memory_space<vmem>>, vector<1x1x2x128xf32>
    %49 = vector.shape_cast %48 : vector<1x1x2x128xf32> to vector<2x128xf32>
    %cst_37 = arith.constant dense<0.000000e+00> : vector<2x128xf32>
    %50 = tpu.matmul %46, %9, %cst_37 {dimension_numbers = #tpu.dot_dimension_numbers<[1], [0], [0], [1], [0, 0, 1, 1], [], []>} : vector<2x32xf32>, vector<32x128xf32>, vector<2x128xf32> -> vector<2x128xf32>
    %51 = arith.addf %49, %50 : vector<2x128xf32>
    %52 = vector.extract_strided_slice %51 {offsets = [0, 0], sizes = [2, 96], strides = [1, 1]} : vector<2x128xf32> to vector<2x96xf32>
    %53 = arith.negf %52 : vector<2x96xf32>
    %54 = math.exp %53 : vector<2x96xf32>
    %cst_38 = arith.constant 1.000000e+00 : f32
    %55 = vector.broadcast %cst_38 : f32 to vector<2x96xf32>
    %56 = arith.addf %55, %54 : vector<2x96xf32>
    %57 = arith.divf %55, %56 : vector<2x96xf32>
    %58 = vector.extract_strided_slice %51 {offsets = [0, 96], sizes = [2, 32], strides = [1, 1]} : vector<2x128xf32> to vector<2x32xf32>
    %59 = math.tanh %58 : vector<2x32xf32>
    %60 = vector.extract_strided_slice %57 {offsets = [0, 0], sizes = [2, 32], strides = [1, 1]} : vector<2x96xf32> to vector<2x32xf32>
    %61 = vector.extract_strided_slice %57 {offsets = [0, 32], sizes = [2, 32], strides = [1, 1]} : vector<2x96xf32> to vector<2x32xf32>
    %62 = vector.extract_strided_slice %57 {offsets = [0, 64], sizes = [2, 32], strides = [1, 1]} : vector<2x96xf32> to vector<2x32xf32>
    %c0_39 = arith.constant 0 : index
    %c0_40 = arith.constant 0 : index
    %63 = vector.load %arg6[%c0_39, %c0_40] : memref<2x32xf32, #tpu.memory_space<vmem>>, vector<2x32xf32>
    %64 = arith.mulf %61, %63 : vector<2x32xf32>
    %65 = arith.mulf %60, %59 : vector<2x32xf32>
    %66 = arith.addf %64, %65 : vector<2x32xf32>
    %67 = math.tanh %66 : vector<2x32xf32>
    %68 = arith.mulf %62, %67 : vector<2x32xf32>
    %c0_41 = arith.constant 0 : index
    %c0_42 = arith.constant 0 : index
    %69 = vector.load %arg6[%c0_41, %c0_42] : memref<2x32xf32, #tpu.memory_space<vmem>>, vector<2x32xf32>
    tpu.vector_store %arg6[%c0_41, %c0_42], %66 {strides = array<i32>} : memref<2x32xf32, #tpu.memory_space<vmem>>, vector<2x32xf32>,
    %c0_43 = arith.constant 0 : index
    %c0_44 = arith.constant 0 : index
    %70 = vector.load %arg5[%c0_43, %c0_44] : memref<2x32xf32, #tpu.memory_space<vmem>>, vector<2x32xf32>
    tpu.vector_store %arg5[%c0_43, %c0_44], %68 {strides = array<i32>} : memref<2x32xf32, #tpu.memory_space<vmem>>, vector<2x32xf32>,
    %c0_45 = arith.constant 0 : index
    %c0_46 = arith.constant 0 : index
    %c0_47 = arith.constant 0 : index
    %71 = vector.load %arg4[%c0_45, %c0_46, %c0_47] : memref<1x2x32xf32, #tpu.memory_space<vmem>>, vector<1x2x32xf32>
    %72 = vector.shape_cast %71 : vector<1x2x32xf32> to vector<2x32xf32>
    %73 = arith.index_cast %c1_i32 : i32 to index
    %c0_48 = arith.constant 0 : index
    %c0_49 = arith.constant 0 : index
    %74 = vector.load %arg2[%73, %c0_48, %c0_49] : memref<8x2x1xf32, #tpu.memory_space<vmem>>, vector<1x2x1xf32>
    %75 = vector.shape_cast %74 : vector<1x2x1xf32> to vector<2x1xf32>
    %76 = vector.broadcast %75 : vector<2x1xf32> to vector<2x32xf32>
    %77 = arith.addf %68, %76 : vector<2x32xf32>
    %78 = arith.maximumf %72, %77 : vector<2x32xf32>
    %c0_50 = arith.constant 0 : index
    %c0_51 = arith.constant 0 : index
    %c0_52 = arith.constant 0 : index
    %79 = vector.load %arg4[%c0_50, %c0_51, %c0_52] : memref<1x2x32xf32, #tpu.memory_space<vmem>>, vector<1x2x32xf32>
    %80 = vector.shape_cast %79 : vector<1x2x32xf32> to vector<2x32xf32>
    %81 = vector.shape_cast %78 : vector<2x32xf32> to vector<1x2x32xf32>
    tpu.vector_store %arg4[%c0_50, %c0_51, %c0_52], %81 {strides = array<i32>} : memref<1x2x32xf32, #tpu.memory_space<vmem>>, vector<1x2x32xf32>,
    %c2_i32 = arith.constant 2 : i32
    %c0_53 = arith.constant 0 : index
    %c0_54 = arith.constant 0 : index
    %82 = vector.load %arg5[%c0_53, %c0_54] : memref<2x32xf32, #tpu.memory_space<vmem>>, vector<2x32xf32>
    %c0_55 = arith.constant 0 : index
    %83 = arith.index_cast %c2_i32 : i32 to index
    %c0_56 = arith.constant 0 : index
    %c0_57 = arith.constant 0 : index
    %84 = vector.load %arg1[%c0_55, %83, %c0_56, %c0_57] : memref<1x8x2x128xf32, #tpu.memory_space<vmem>>, vector<1x1x2x128xf32>
    %85 = vector.shape_cast %84 : vector<1x1x2x128xf32> to vector<2x128xf32>
    %cst_58 = arith.constant dense<0.000000e+00> : vector<2x128xf32>
    %86 = tpu.matmul %82, %9, %cst_58 {dimension_numbers = #tpu.dot_dimension_numbers<[1], [0], [0], [1], [0, 0, 1, 1], [], []>} : vector<2x32xf32>, vector<32x128xf32>, vector<2x128xf32> -> vector<2x128xf32>
    %87 = arith.addf %85, %86 : vector<2x128xf32>
    %88 = vector.extract_strided_slice %87 {offsets = [0, 0], sizes = [2, 96], strides = [1, 1]} : vector<2x128xf32> to vector<2x96xf32>
    %89 = arith.negf %88 : vector<2x96xf32>
    %90 = math.exp %89 : vector<2x96xf32>
    %cst_59 = arith.constant 1.000000e+00 : f32
    %91 = vector.broadcast %cst_59 : f32 to vector<2x96xf32>
    %92 = arith.addf %91, %90 : vector<2x96xf32>
    %93 = arith.divf %91, %92 : vector<2x96xf32>
    %94 = vector.extract_strided_slice %87 {offsets = [0, 96], sizes = [2, 32], strides = [1, 1]} : vector<2x128xf32> to vector<2x32xf32>
    %95 = math.tanh %94 : vector<2x32xf32>
    %96 = vector.extract_strided_slice %93 {offsets = [0, 0], sizes = [2, 32], strides = [1, 1]} : vector<2x96xf32> to vector<2x32xf32>
    %97 = vector.extract_strided_slice %93 {offsets = [0, 32], sizes = [2, 32], strides = [1, 1]} : vector<2x96xf32> to vector<2x32xf32>
    %98 = vector.extract_strided_slice %93 {offsets = [0, 64], sizes = [2, 32], strides = [1, 1]} : vector<2x96xf32> to vector<2x32xf32>
    %c0_60 = arith.constant 0 : index
    %c0_61 = arith.constant 0 : index
    %99 = vector.load %arg6[%c0_60, %c0_61] : memref<2x32xf32, #tpu.memory_space<vmem>>, vector<2x32xf32>
    %100 = arith.mulf %97, %99 : vector<2x32xf32>
    %101 = arith.mulf %96, %95 : vector<2x32xf32>
    %102 = arith.addf %100, %101 : vector<2x32xf32>
    %103 = math.tanh %102 : vector<2x32xf32>
    %104 = arith.mulf %98, %103 : vector<2x32xf32>
    %c0_62 = arith.constant 0 : index
    %c0_63 = arith.constant 0 : index
    %105 = vector.load %arg6[%c0_62, %c0_63] : memref<2x32xf32, #tpu.memory_space<vmem>>, vector<2x32xf32>
    tpu.vector_store %arg6[%c0_62, %c0_63], %102 {strides = array<i32>} : memref<2x32xf32, #tpu.memory_space<vmem>>, vector<2x32xf32>,
    %c0_64 = arith.constant 0 : index
    %c0_65 = arith.constant 0 : index
    %106 = vector.load %arg5[%c0_64, %c0_65] : memref<2x32xf32, #tpu.memory_space<vmem>>, vector<2x32xf32>
    tpu.vector_store %arg5[%c0_64, %c0_65], %104 {strides = array<i32>} : memref<2x32xf32, #tpu.memory_space<vmem>>, vector<2x32xf32>,
    %c0_66 = arith.constant 0 : index
    %c0_67 = arith.constant 0 : index
    %c0_68 = arith.constant 0 : index
    %107 = vector.load %arg4[%c0_66, %c0_67, %c0_68] : memref<1x2x32xf32, #tpu.memory_space<vmem>>, vector<1x2x32xf32>
    %108 = vector.shape_cast %107 : vector<1x2x32xf32> to vector<2x32xf32>
    %109 = arith.index_cast %c2_i32 : i32 to index
    %c0_69 = arith.constant 0 : index
    %c0_70 = arith.constant 0 : index
    %110 = vector.load %arg2[%109, %c0_69, %c0_70] : memref<8x2x1xf32, #tpu.memory_space<vmem>>, vector<1x2x1xf32>
    %111 = vector.shape_cast %110 : vector<1x2x1xf32> to vector<2x1xf32>
    %112 = vector.broadcast %111 : vector<2x1xf32> to vector<2x32xf32>
    %113 = arith.addf %104, %112 : vector<2x32xf32>
    %114 = arith.maximumf %108, %113 : vector<2x32xf32>
    %c0_71 = arith.constant 0 : index
    %c0_72 = arith.constant 0 : index
    %c0_73 = arith.constant 0 : index
    %115 = vector.load %arg4[%c0_71, %c0_72, %c0_73] : memref<1x2x32xf32, #tpu.memory_space<vmem>>, vector<1x2x32xf32>
    %116 = vector.shape_cast %115 : vector<1x2x32xf32> to vector<2x32xf32>
    %117 = vector.shape_cast %114 : vector<2x32xf32> to vector<1x2x32xf32>
    tpu.vector_store %arg4[%c0_71, %c0_72, %c0_73], %117 {strides = array<i32>} : memref<1x2x32xf32, #tpu.memory_space<vmem>>, vector<1x2x32xf32>,
    %c3_i32 = arith.constant 3 : i32
    %c0_74 = arith.constant 0 : index
    %c0_75 = arith.constant 0 : index
    %118 = vector.load %arg5[%c0_74, %c0_75] : memref<2x32xf32, #tpu.memory_space<vmem>>, vector<2x32xf32>
    %c0_76 = arith.constant 0 : index
    %119 = arith.index_cast %c3_i32 : i32 to index
    %c0_77 = arith.constant 0 : index
    %c0_78 = arith.constant 0 : index
    %120 = vector.load %arg1[%c0_76, %119, %c0_77, %c0_78] : memref<1x8x2x128xf32, #tpu.memory_space<vmem>>, vector<1x1x2x128xf32>
    %121 = vector.shape_cast %120 : vector<1x1x2x128xf32> to vector<2x128xf32>
    %cst_79 = arith.constant dense<0.000000e+00> : vector<2x128xf32>
    %122 = tpu.matmul %118, %9, %cst_79 {dimension_numbers = #tpu.dot_dimension_numbers<[1], [0], [0], [1], [0, 0, 1, 1], [], []>} : vector<2x32xf32>, vector<32x128xf32>, vector<2x128xf32> -> vector<2x128xf32>
    %123 = arith.addf %121, %122 : vector<2x128xf32>
    %124 = vector.extract_strided_slice %123 {offsets = [0, 0], sizes = [2, 96], strides = [1, 1]} : vector<2x128xf32> to vector<2x96xf32>
    %125 = arith.negf %124 : vector<2x96xf32>
    %126 = math.exp %125 : vector<2x96xf32>
    %cst_80 = arith.constant 1.000000e+00 : f32
    %127 = vector.broadcast %cst_80 : f32 to vector<2x96xf32>
    %128 = arith.addf %127, %126 : vector<2x96xf32>
    %129 = arith.divf %127, %128 : vector<2x96xf32>
    %130 = vector.extract_strided_slice %123 {offsets = [0, 96], sizes = [2, 32], strides = [1, 1]} : vector<2x128xf32> to vector<2x32xf32>
    %131 = math.tanh %130 : vector<2x32xf32>
    %132 = vector.extract_strided_slice %129 {offsets = [0, 0], sizes = [2, 32], strides = [1, 1]} : vector<2x96xf32> to vector<2x32xf32>
    %133 = vector.extract_strided_slice %129 {offsets = [0, 32], sizes = [2, 32], strides = [1, 1]} : vector<2x96xf32> to vector<2x32xf32>
    %134 = vector.extract_strided_slice %129 {offsets = [0, 64], sizes = [2, 32], strides = [1, 1]} : vector<2x96xf32> to vector<2x32xf32>
    %c0_81 = arith.constant 0 : index
    %c0_82 = arith.constant 0 : index
    %135 = vector.load %arg6[%c0_81, %c0_82] : memref<2x32xf32, #tpu.memory_space<vmem>>, vector<2x32xf32>
    %136 = arith.mulf %133, %135 : vector<2x32xf32>
    %137 = arith.mulf %132, %131 : vector<2x32xf32>
    %138 = arith.addf %136, %137 : vector<2x32xf32>
    %139 = math.tanh %138 : vector<2x32xf32>
    %140 = arith.mulf %134, %139 : vector<2x32xf32>
    %c0_83 = arith.constant 0 : index
    %c0_84 = arith.constant 0 : index
    %141 = vector.load %arg6[%c0_83, %c0_84] : memref<2x32xf32, #tpu.memory_space<vmem>>, vector<2x32xf32>
    tpu.vector_store %arg6[%c0_83, %c0_84], %138 {strides = array<i32>} : memref<2x32xf32, #tpu.memory_space<vmem>>, vector<2x32xf32>,
    %c0_85 = arith.constant 0 : index
    %c0_86 = arith.constant 0 : index
    %142 = vector.load %arg5[%c0_85, %c0_86] : memref<2x32xf32, #tpu.memory_space<vmem>>, vector<2x32xf32>
    tpu.vector_store %arg5[%c0_85, %c0_86], %140 {strides = array<i32>} : memref<2x32xf32, #tpu.memory_space<vmem>>, vector<2x32xf32>,
    %c0_87 = arith.constant 0 : index
    %c0_88 = arith.constant 0 : index
    %c0_89 = arith.constant 0 : index
    %143 = vector.load %arg4[%c0_87, %c0_88, %c0_89] : memref<1x2x32xf32, #tpu.memory_space<vmem>>, vector<1x2x32xf32>
    %144 = vector.shape_cast %143 : vector<1x2x32xf32> to vector<2x32xf32>
    %145 = arith.index_cast %c3_i32 : i32 to index
    %c0_90 = arith.constant 0 : index
    %c0_91 = arith.constant 0 : index
    %146 = vector.load %arg2[%145, %c0_90, %c0_91] : memref<8x2x1xf32, #tpu.memory_space<vmem>>, vector<1x2x1xf32>
    %147 = vector.shape_cast %146 : vector<1x2x1xf32> to vector<2x1xf32>
    %148 = vector.broadcast %147 : vector<2x1xf32> to vector<2x32xf32>
    %149 = arith.addf %140, %148 : vector<2x32xf32>
    %150 = arith.maximumf %144, %149 : vector<2x32xf32>
    %c0_92 = arith.constant 0 : index
    %c0_93 = arith.constant 0 : index
    %c0_94 = arith.constant 0 : index
    %151 = vector.load %arg4[%c0_92, %c0_93, %c0_94] : memref<1x2x32xf32, #tpu.memory_space<vmem>>, vector<1x2x32xf32>
    %152 = vector.shape_cast %151 : vector<1x2x32xf32> to vector<2x32xf32>
    %153 = vector.shape_cast %150 : vector<2x32xf32> to vector<1x2x32xf32>
    tpu.vector_store %arg4[%c0_92, %c0_93, %c0_94], %153 {strides = array<i32>} : memref<1x2x32xf32, #tpu.memory_space<vmem>>, vector<1x2x32xf32>,
    %c4_i32 = arith.constant 4 : i32
    %c0_95 = arith.constant 0 : index
    %c0_96 = arith.constant 0 : index
    %154 = vector.load %arg5[%c0_95, %c0_96] : memref<2x32xf32, #tpu.memory_space<vmem>>, vector<2x32xf32>
    %c0_97 = arith.constant 0 : index
    %155 = arith.index_cast %c4_i32 : i32 to index
    %c0_98 = arith.constant 0 : index
    %c0_99 = arith.constant 0 : index
    %156 = vector.load %arg1[%c0_97, %155, %c0_98, %c0_99] : memref<1x8x2x128xf32, #tpu.memory_space<vmem>>, vector<1x1x2x128xf32>
    %157 = vector.shape_cast %156 : vector<1x1x2x128xf32> to vector<2x128xf32>
    %cst_100 = arith.constant dense<0.000000e+00> : vector<2x128xf32>
    %158 = tpu.matmul %154, %9, %cst_100 {dimension_numbers = #tpu.dot_dimension_numbers<[1], [0], [0], [1], [0, 0, 1, 1], [], []>} : vector<2x32xf32>, vector<32x128xf32>, vector<2x128xf32> -> vector<2x128xf32>
    %159 = arith.addf %157, %158 : vector<2x128xf32>
    %160 = vector.extract_strided_slice %159 {offsets = [0, 0], sizes = [2, 96], strides = [1, 1]} : vector<2x128xf32> to vector<2x96xf32>
    %161 = arith.negf %160 : vector<2x96xf32>
    %162 = math.exp %161 : vector<2x96xf32>
    %cst_101 = arith.constant 1.000000e+00 : f32
    %163 = vector.broadcast %cst_101 : f32 to vector<2x96xf32>
    %164 = arith.addf %163, %162 : vector<2x96xf32>
    %165 = arith.divf %163, %164 : vector<2x96xf32>
    %166 = vector.extract_strided_slice %159 {offsets = [0, 96], sizes = [2, 32], strides = [1, 1]} : vector<2x128xf32> to vector<2x32xf32>
    %167 = math.tanh %166 : vector<2x32xf32>
    %168 = vector.extract_strided_slice %165 {offsets = [0, 0], sizes = [2, 32], strides = [1, 1]} : vector<2x96xf32> to vector<2x32xf32>
    %169 = vector.extract_strided_slice %165 {offsets = [0, 32], sizes = [2, 32], strides = [1, 1]} : vector<2x96xf32> to vector<2x32xf32>
    %170 = vector.extract_strided_slice %165 {offsets = [0, 64], sizes = [2, 32], strides = [1, 1]} : vector<2x96xf32> to vector<2x32xf32>
    %c0_102 = arith.constant 0 : index
    %c0_103 = arith.constant 0 : index
    %171 = vector.load %arg6[%c0_102, %c0_103] : memref<2x32xf32, #tpu.memory_space<vmem>>, vector<2x32xf32>
    %172 = arith.mulf %169, %171 : vector<2x32xf32>
    %173 = arith.mulf %168, %167 : vector<2x32xf32>
    %174 = arith.addf %172, %173 : vector<2x32xf32>
    %175 = math.tanh %174 : vector<2x32xf32>
    %176 = arith.mulf %170, %175 : vector<2x32xf32>
    %c0_104 = arith.constant 0 : index
    %c0_105 = arith.constant 0 : index
    %177 = vector.load %arg6[%c0_104, %c0_105] : memref<2x32xf32, #tpu.memory_space<vmem>>, vector<2x32xf32>
    tpu.vector_store %arg6[%c0_104, %c0_105], %174 {strides = array<i32>} : memref<2x32xf32, #tpu.memory_space<vmem>>, vector<2x32xf32>,
    %c0_106 = arith.constant 0 : index
    %c0_107 = arith.constant 0 : index
    %178 = vector.load %arg5[%c0_106, %c0_107] : memref<2x32xf32, #tpu.memory_space<vmem>>, vector<2x32xf32>
    tpu.vector_store %arg5[%c0_106, %c0_107], %176 {strides = array<i32>} : memref<2x32xf32, #tpu.memory_space<vmem>>, vector<2x32xf32>,
    %c0_108 = arith.constant 0 : index
    %c0_109 = arith.constant 0 : index
    %c0_110 = arith.constant 0 : index
    %179 = vector.load %arg4[%c0_108, %c0_109, %c0_110] : memref<1x2x32xf32, #tpu.memory_space<vmem>>, vector<1x2x32xf32>
    %180 = vector.shape_cast %179 : vector<1x2x32xf32> to vector<2x32xf32>
    %181 = arith.index_cast %c4_i32 : i32 to index
    %c0_111 = arith.constant 0 : index
    %c0_112 = arith.constant 0 : index
    %182 = vector.load %arg2[%181, %c0_111, %c0_112] : memref<8x2x1xf32, #tpu.memory_space<vmem>>, vector<1x2x1xf32>
    %183 = vector.shape_cast %182 : vector<1x2x1xf32> to vector<2x1xf32>
    %184 = vector.broadcast %183 : vector<2x1xf32> to vector<2x32xf32>
    %185 = arith.addf %176, %184 : vector<2x32xf32>
    %186 = arith.maximumf %180, %185 : vector<2x32xf32>
    %c0_113 = arith.constant 0 : index
    %c0_114 = arith.constant 0 : index
    %c0_115 = arith.constant 0 : index
    %187 = vector.load %arg4[%c0_113, %c0_114, %c0_115] : memref<1x2x32xf32, #tpu.memory_space<vmem>>, vector<1x2x32xf32>
    %188 = vector.shape_cast %187 : vector<1x2x32xf32> to vector<2x32xf32>
    %189 = vector.shape_cast %186 : vector<2x32xf32> to vector<1x2x32xf32>
    tpu.vector_store %arg4[%c0_113, %c0_114, %c0_115], %189 {strides = array<i32>} : memref<1x2x32xf32, #tpu.memory_space<vmem>>, vector<1x2x32xf32>,
    %c5_i32 = arith.constant 5 : i32
    %c0_116 = arith.constant 0 : index
    %c0_117 = arith.constant 0 : index
    %190 = vector.load %arg5[%c0_116, %c0_117] : memref<2x32xf32, #tpu.memory_space<vmem>>, vector<2x32xf32>
    %c0_118 = arith.constant 0 : index
    %191 = arith.index_cast %c5_i32 : i32 to index
    %c0_119 = arith.constant 0 : index
    %c0_120 = arith.constant 0 : index
    %192 = vector.load %arg1[%c0_118, %191, %c0_119, %c0_120] : memref<1x8x2x128xf32, #tpu.memory_space<vmem>>, vector<1x1x2x128xf32>
    %193 = vector.shape_cast %192 : vector<1x1x2x128xf32> to vector<2x128xf32>
    %cst_121 = arith.constant dense<0.000000e+00> : vector<2x128xf32>
    %194 = tpu.matmul %190, %9, %cst_121 {dimension_numbers = #tpu.dot_dimension_numbers<[1], [0], [0], [1], [0, 0, 1, 1], [], []>} : vector<2x32xf32>, vector<32x128xf32>, vector<2x128xf32> -> vector<2x128xf32>
    %195 = arith.addf %193, %194 : vector<2x128xf32>
    %196 = vector.extract_strided_slice %195 {offsets = [0, 0], sizes = [2, 96], strides = [1, 1]} : vector<2x128xf32> to vector<2x96xf32>
    %197 = arith.negf %196 : vector<2x96xf32>
    %198 = math.exp %197 : vector<2x96xf32>
    %cst_122 = arith.constant 1.000000e+00 : f32
    %199 = vector.broadcast %cst_122 : f32 to vector<2x96xf32>
    %200 = arith.addf %199, %198 : vector<2x96xf32>
    %201 = arith.divf %199, %200 : vector<2x96xf32>
    %202 = vector.extract_strided_slice %195 {offsets = [0, 96], sizes = [2, 32], strides = [1, 1]} : vector<2x128xf32> to vector<2x32xf32>
    %203 = math.tanh %202 : vector<2x32xf32>
    %204 = vector.extract_strided_slice %201 {offsets = [0, 0], sizes = [2, 32], strides = [1, 1]} : vector<2x96xf32> to vector<2x32xf32>
    %205 = vector.extract_strided_slice %201 {offsets = [0, 32], sizes = [2, 32], strides = [1, 1]} : vector<2x96xf32> to vector<2x32xf32>
    %206 = vector.extract_strided_slice %201 {offsets = [0, 64], sizes = [2, 32], strides = [1, 1]} : vector<2x96xf32> to vector<2x32xf32>
    %c0_123 = arith.constant 0 : index
    %c0_124 = arith.constant 0 : index
    %207 = vector.load %arg6[%c0_123, %c0_124] : memref<2x32xf32, #tpu.memory_space<vmem>>, vector<2x32xf32>
    %208 = arith.mulf %205, %207 : vector<2x32xf32>
    %209 = arith.mulf %204, %203 : vector<2x32xf32>
    %210 = arith.addf %208, %209 : vector<2x32xf32>
    %211 = math.tanh %210 : vector<2x32xf32>
    %212 = arith.mulf %206, %211 : vector<2x32xf32>
    %c0_125 = arith.constant 0 : index
    %c0_126 = arith.constant 0 : index
    %213 = vector.load %arg6[%c0_125, %c0_126] : memref<2x32xf32, #tpu.memory_space<vmem>>, vector<2x32xf32>
    tpu.vector_store %arg6[%c0_125, %c0_126], %210 {strides = array<i32>} : memref<2x32xf32, #tpu.memory_space<vmem>>, vector<2x32xf32>,
    %c0_127 = arith.constant 0 : index
    %c0_128 = arith.constant 0 : index
    %214 = vector.load %arg5[%c0_127, %c0_128] : memref<2x32xf32, #tpu.memory_space<vmem>>, vector<2x32xf32>
    tpu.vector_store %arg5[%c0_127, %c0_128], %212 {strides = array<i32>} : memref<2x32xf32, #tpu.memory_space<vmem>>, vector<2x32xf32>,
    %c0_129 = arith.constant 0 : index
    %c0_130 = arith.constant 0 : index
    %c0_131 = arith.constant 0 : index
    %215 = vector.load %arg4[%c0_129, %c0_130, %c0_131] : memref<1x2x32xf32, #tpu.memory_space<vmem>>, vector<1x2x32xf32>
    %216 = vector.shape_cast %215 : vector<1x2x32xf32> to vector<2x32xf32>
    %217 = arith.index_cast %c5_i32 : i32 to index
    %c0_132 = arith.constant 0 : index
    %c0_133 = arith.constant 0 : index
    %218 = vector.load %arg2[%217, %c0_132, %c0_133] : memref<8x2x1xf32, #tpu.memory_space<vmem>>, vector<1x2x1xf32>
    %219 = vector.shape_cast %218 : vector<1x2x1xf32> to vector<2x1xf32>
    %220 = vector.broadcast %219 : vector<2x1xf32> to vector<2x32xf32>
    %221 = arith.addf %212, %220 : vector<2x32xf32>
    %222 = arith.maximumf %216, %221 : vector<2x32xf32>
    %c0_134 = arith.constant 0 : index
    %c0_135 = arith.constant 0 : index
    %c0_136 = arith.constant 0 : index
    %223 = vector.load %arg4[%c0_134, %c0_135, %c0_136] : memref<1x2x32xf32, #tpu.memory_space<vmem>>, vector<1x2x32xf32>
    %224 = vector.shape_cast %223 : vector<1x2x32xf32> to vector<2x32xf32>
    %225 = vector.shape_cast %222 : vector<2x32xf32> to vector<1x2x32xf32>
    tpu.vector_store %arg4[%c0_134, %c0_135, %c0_136], %225 {strides = array<i32>} : memref<1x2x32xf32, #tpu.memory_space<vmem>>, vector<1x2x32xf32>,
    %c6_i32 = arith.constant 6 : i32
    %c0_137 = arith.constant 0 : index
    %c0_138 = arith.constant 0 : index
    %226 = vector.load %arg5[%c0_137, %c0_138] : memref<2x32xf32, #tpu.memory_space<vmem>>, vector<2x32xf32>
    %c0_139 = arith.constant 0 : index
    %227 = arith.index_cast %c6_i32 : i32 to index
    %c0_140 = arith.constant 0 : index
    %c0_141 = arith.constant 0 : index
    %228 = vector.load %arg1[%c0_139, %227, %c0_140, %c0_141] : memref<1x8x2x128xf32, #tpu.memory_space<vmem>>, vector<1x1x2x128xf32>
    %229 = vector.shape_cast %228 : vector<1x1x2x128xf32> to vector<2x128xf32>
    %cst_142 = arith.constant dense<0.000000e+00> : vector<2x128xf32>
    %230 = tpu.matmul %226, %9, %cst_142 {dimension_numbers = #tpu.dot_dimension_numbers<[1], [0], [0], [1], [0, 0, 1, 1], [], []>} : vector<2x32xf32>, vector<32x128xf32>, vector<2x128xf32> -> vector<2x128xf32>
    %231 = arith.addf %229, %230 : vector<2x128xf32>
    %232 = vector.extract_strided_slice %231 {offsets = [0, 0], sizes = [2, 96], strides = [1, 1]} : vector<2x128xf32> to vector<2x96xf32>
    %233 = arith.negf %232 : vector<2x96xf32>
    %234 = math.exp %233 : vector<2x96xf32>
    %cst_143 = arith.constant 1.000000e+00 : f32
    %235 = vector.broadcast %cst_143 : f32 to vector<2x96xf32>
    %236 = arith.addf %235, %234 : vector<2x96xf32>
    %237 = arith.divf %235, %236 : vector<2x96xf32>
    %238 = vector.extract_strided_slice %231 {offsets = [0, 96], sizes = [2, 32], strides = [1, 1]} : vector<2x128xf32> to vector<2x32xf32>
    %239 = math.tanh %238 : vector<2x32xf32>
    %240 = vector.extract_strided_slice %237 {offsets = [0, 0], sizes = [2, 32], strides = [1, 1]} : vector<2x96xf32> to vector<2x32xf32>
    %241 = vector.extract_strided_slice %237 {offsets = [0, 32], sizes = [2, 32], strides = [1, 1]} : vector<2x96xf32> to vector<2x32xf32>
    %242 = vector.extract_strided_slice %237 {offsets = [0, 64], sizes = [2, 32], strides = [1, 1]} : vector<2x96xf32> to vector<2x32xf32>
    %c0_144 = arith.constant 0 : index
    %c0_145 = arith.constant 0 : index
    %243 = vector.load %arg6[%c0_144, %c0_145] : memref<2x32xf32, #tpu.memory_space<vmem>>, vector<2x32xf32>
    %244 = arith.mulf %241, %243 : vector<2x32xf32>
    %245 = arith.mulf %240, %239 : vector<2x32xf32>
    %246 = arith.addf %244, %245 : vector<2x32xf32>
    %247 = math.tanh %246 : vector<2x32xf32>
    %248 = arith.mulf %242, %247 : vector<2x32xf32>
    %c0_146 = arith.constant 0 : index
    %c0_147 = arith.constant 0 : index
    %249 = vector.load %arg6[%c0_146, %c0_147] : memref<2x32xf32, #tpu.memory_space<vmem>>, vector<2x32xf32>
    tpu.vector_store %arg6[%c0_146, %c0_147], %246 {strides = array<i32>} : memref<2x32xf32, #tpu.memory_space<vmem>>, vector<2x32xf32>,
    %c0_148 = arith.constant 0 : index
    %c0_149 = arith.constant 0 : index
    %250 = vector.load %arg5[%c0_148, %c0_149] : memref<2x32xf32, #tpu.memory_space<vmem>>, vector<2x32xf32>
    tpu.vector_store %arg5[%c0_148, %c0_149], %248 {strides = array<i32>} : memref<2x32xf32, #tpu.memory_space<vmem>>, vector<2x32xf32>,
    %c0_150 = arith.constant 0 : index
    %c0_151 = arith.constant 0 : index
    %c0_152 = arith.constant 0 : index
    %251 = vector.load %arg4[%c0_150, %c0_151, %c0_152] : memref<1x2x32xf32, #tpu.memory_space<vmem>>, vector<1x2x32xf32>
    %252 = vector.shape_cast %251 : vector<1x2x32xf32> to vector<2x32xf32>
    %253 = arith.index_cast %c6_i32 : i32 to index
    %c0_153 = arith.constant 0 : index
    %c0_154 = arith.constant 0 : index
    %254 = vector.load %arg2[%253, %c0_153, %c0_154] : memref<8x2x1xf32, #tpu.memory_space<vmem>>, vector<1x2x1xf32>
    %255 = vector.shape_cast %254 : vector<1x2x1xf32> to vector<2x1xf32>
    %256 = vector.broadcast %255 : vector<2x1xf32> to vector<2x32xf32>
    %257 = arith.addf %248, %256 : vector<2x32xf32>
    %258 = arith.maximumf %252, %257 : vector<2x32xf32>
    %c0_155 = arith.constant 0 : index
    %c0_156 = arith.constant 0 : index
    %c0_157 = arith.constant 0 : index
    %259 = vector.load %arg4[%c0_155, %c0_156, %c0_157] : memref<1x2x32xf32, #tpu.memory_space<vmem>>, vector<1x2x32xf32>
    %260 = vector.shape_cast %259 : vector<1x2x32xf32> to vector<2x32xf32>
    %261 = vector.shape_cast %258 : vector<2x32xf32> to vector<1x2x32xf32>
    tpu.vector_store %arg4[%c0_155, %c0_156, %c0_157], %261 {strides = array<i32>} : memref<1x2x32xf32, #tpu.memory_space<vmem>>, vector<1x2x32xf32>,
    %c7_i32 = arith.constant 7 : i32
    %c0_158 = arith.constant 0 : index
    %c0_159 = arith.constant 0 : index
    %262 = vector.load %arg5[%c0_158, %c0_159] : memref<2x32xf32, #tpu.memory_space<vmem>>, vector<2x32xf32>
    %c0_160 = arith.constant 0 : index
    %263 = arith.index_cast %c7_i32 : i32 to index
    %c0_161 = arith.constant 0 : index
    %c0_162 = arith.constant 0 : index
    %264 = vector.load %arg1[%c0_160, %263, %c0_161, %c0_162] : memref<1x8x2x128xf32, #tpu.memory_space<vmem>>, vector<1x1x2x128xf32>
    %265 = vector.shape_cast %264 : vector<1x1x2x128xf32> to vector<2x128xf32>
    %cst_163 = arith.constant dense<0.000000e+00> : vector<2x128xf32>
    %266 = tpu.matmul %262, %9, %cst_163 {dimension_numbers = #tpu.dot_dimension_numbers<[1], [0], [0], [1], [0, 0, 1, 1], [], []>} : vector<2x32xf32>, vector<32x128xf32>, vector<2x128xf32> -> vector<2x128xf32>
    %267 = arith.addf %265, %266 : vector<2x128xf32>
    %268 = vector.extract_strided_slice %267 {offsets = [0, 0], sizes = [2, 96], strides = [1, 1]} : vector<2x128xf32> to vector<2x96xf32>
    %269 = arith.negf %268 : vector<2x96xf32>
    %270 = math.exp %269 : vector<2x96xf32>
    %cst_164 = arith.constant 1.000000e+00 : f32
    %271 = vector.broadcast %cst_164 : f32 to vector<2x96xf32>
    %272 = arith.addf %271, %270 : vector<2x96xf32>
    %273 = arith.divf %271, %272 : vector<2x96xf32>
    %274 = vector.extract_strided_slice %267 {offsets = [0, 96], sizes = [2, 32], strides = [1, 1]} : vector<2x128xf32> to vector<2x32xf32>
    %275 = math.tanh %274 : vector<2x32xf32>
    %276 = vector.extract_strided_slice %273 {offsets = [0, 0], sizes = [2, 32], strides = [1, 1]} : vector<2x96xf32> to vector<2x32xf32>
    %277 = vector.extract_strided_slice %273 {offsets = [0, 32], sizes = [2, 32], strides = [1, 1]} : vector<2x96xf32> to vector<2x32xf32>
    %278 = vector.extract_strided_slice %273 {offsets = [0, 64], sizes = [2, 32], strides = [1, 1]} : vector<2x96xf32> to vector<2x32xf32>
    %c0_165 = arith.constant 0 : index
    %c0_166 = arith.constant 0 : index
    %279 = vector.load %arg6[%c0_165, %c0_166] : memref<2x32xf32, #tpu.memory_space<vmem>>, vector<2x32xf32>
    %280 = arith.mulf %277, %279 : vector<2x32xf32>
    %281 = arith.mulf %276, %275 : vector<2x32xf32>
    %282 = arith.addf %280, %281 : vector<2x32xf32>
    %283 = math.tanh %282 : vector<2x32xf32>
    %284 = arith.mulf %278, %283 : vector<2x32xf32>
    %c0_167 = arith.constant 0 : index
    %c0_168 = arith.constant 0 : index
    %285 = vector.load %arg6[%c0_167, %c0_168] : memref<2x32xf32, #tpu.memory_space<vmem>>, vector<2x32xf32>
    tpu.vector_store %arg6[%c0_167, %c0_168], %282 {strides = array<i32>} : memref<2x32xf32, #tpu.memory_space<vmem>>, vector<2x32xf32>,
    %c0_169 = arith.constant 0 : index
    %c0_170 = arith.constant 0 : index
    %286 = vector.load %arg5[%c0_169, %c0_170] : memref<2x32xf32, #tpu.memory_space<vmem>>, vector<2x32xf32>
    tpu.vector_store %arg5[%c0_169, %c0_170], %284 {strides = array<i32>} : memref<2x32xf32, #tpu.memory_space<vmem>>, vector<2x32xf32>,
    %c0_171 = arith.constant 0 : index
    %c0_172 = arith.constant 0 : index
    %c0_173 = arith.constant 0 : index
    %287 = vector.load %arg4[%c0_171, %c0_172, %c0_173] : memref<1x2x32xf32, #tpu.memory_space<vmem>>, vector<1x2x32xf32>
    %288 = vector.shape_cast %287 : vector<1x2x32xf32> to vector<2x32xf32>
    %289 = arith.index_cast %c7_i32 : i32 to index
    %c0_174 = arith.constant 0 : index
    %c0_175 = arith.constant 0 : index
    %290 = vector.load %arg2[%289, %c0_174, %c0_175] : memref<8x2x1xf32, #tpu.memory_space<vmem>>, vector<1x2x1xf32>
    %291 = vector.shape_cast %290 : vector<1x2x1xf32> to vector<2x1xf32>
    %292 = vector.broadcast %291 : vector<2x1xf32> to vector<2x32xf32>
    %293 = arith.addf %284, %292 : vector<2x32xf32>
    %294 = arith.maximumf %288, %293 : vector<2x32xf32>
    %c0_176 = arith.constant 0 : index
    %c0_177 = arith.constant 0 : index
    %c0_178 = arith.constant 0 : index
    %295 = vector.load %arg4[%c0_176, %c0_177, %c0_178] : memref<1x2x32xf32, #tpu.memory_space<vmem>>, vector<1x2x32xf32>
    %296 = vector.shape_cast %295 : vector<1x2x32xf32> to vector<2x32xf32>
    %297 = vector.shape_cast %294 : vector<2x32xf32> to vector<1x2x32xf32>
    tpu.vector_store %arg4[%c0_176, %c0_177, %c0_178], %297 {strides = array<i32>} : memref<1x2x32xf32, #tpu.memory_space<vmem>>, vector<1x2x32xf32>,
    %c8_i32 = arith.constant 8 : i32
    return
  }
  func.func @transform_0(%arg0: i32) -> (i32, i32, i32, i32) {
    %c0_i32 = arith.constant 0 : i32
    %c0_i32_0 = arith.constant 0 : i32
    %c0_i32_1 = arith.constant 0 : i32
    %c0_i32_2 = arith.constant 0 : i32
    return %arg0, %c0_i32, %c0_i32_0, %c0_i32_1 : i32, i32, i32, i32
  }
  func.func @transform_1(%arg0: i32) -> (i32, i32, i32) {
    %c0_i32 = arith.constant 0 : i32
    %c0_i32_0 = arith.constant 0 : i32
    %c0_i32_1 = arith.constant 0 : i32
    %c0_i32_2 = arith.constant 0 : i32
    return %c0_i32, %c0_i32_0, %c0_i32_1 : i32, i32, i32
  }
  func.func @transform_2(%arg0: i32) -> (i32, i32, i32) {
    %c0_i32 = arith.constant 0 : i32
    %c0_i32_0 = arith.constant 0 : i32
    %c0_i32_1 = arith.constant 0 : i32
    return %arg0, %c0_i32, %c0_i32_0 : i32, i32, i32
  }
  func.func @transform_3(%arg0: i32) -> (i32, i32, i32) {
    %c0_i32 = arith.constant 0 : i32
    %c0_i32_0 = arith.constant 0 : i32
    %c0_i32_1 = arith.constant 0 : i32
    return %arg0, %c0_i32, %c0_i32_0 : i32, i32, i32
  }
}

</mosaic_0001>

<llo_original>
// kernel: bilstm_forward.1
$region0: #{bilstm_forward.1}
  #allocation0 [shape = 'u32[]', space=smem, size = 0x4, offset = 0x4, fixed_abs, tag = 'smem constant byte address 0x4 - core index']
  #allocation1 [shape = 'u32[144,128]{1,0:T(1,128)}', space=vmem, size = 0x12000, scoped, tag = 'internal scratch']
  #allocation2 [shape = 'f32[2,32]{1,0:T(2,128)}', space=vmem, size = 0x400, scoped, tag = 'scratch operand']
  #allocation3 [shape = 'f32[2,32]{1,0:T(2,128)}', space=vmem, size = 0x400, scoped, tag = 'scratch operand']
  %s0 = inlined_call_operand.vmem [shape: f32[2,8,2,128], index: 0, kind: input, shape index: {}]
  %s1 = inlined_call_operand.vmem [shape: f32[8,2,1], index: 1, kind: input, shape index: {}]
  %s2 = inlined_call_operand.vmem [shape: f32[2,32,128], index: 2, kind: input, shape index: {}]
  %s3 = inlined_call_operand.vmem [shape: f32[2,2,32], index: 3, kind: output, shape index: {}]
  %s4 = sld [smem:[#allocation0]]
  $region45: #{bilstm_forward.1} parent=0
    _
  %s6 = ssub.s32 1, %s4
  %s7 = scalar_select 0, %s6, %s4
  loop: start=0, step=1, limit=4
  $region2: #{bilstm_forward.1} parent=0 // loop_pre_header
    _
  $region3: #{bilstm_forward.1} parent=0 // loop_header
    %s9 = sphi 0, %s13
    %p10 = scmp.ge.s32.totalorder %s9, 4
    %s19 = sphi 0, %s21
    %s22 = sphi 0, %s19
    %s23 = sphi 0, %s22
    %s39 = sphi 0, %s23
    %s43 = sphi 0, %s43
    %s45 = sphi 0, %s43
    %s46 = sphi 0, %s45
    %s60 = sphi 0, %s46
    %s66 = sphi 0, %s68
    %s69 = sphi 0, %s66
    %s70 = sphi 0, %s69
    %s86 = sphi 0, %s70
    %s92 = sphi 0, %s94
    %s95 = sphi 0, %s92
    %s96 = sphi 0, %s95
    %s112 = sphi 0, %s96
  $region4: #{bilstm_forward.1} parent=0 // loop_header_branch
    %12 = sbr.rel (%p10) target = $region8
  $region5: #{bilstm_forward.1} parent=0 // loop_body
    %s14 = ssub.s32 %s9, 1
    %s15 = ssub.s32 %s9, 2
    %s16 = sadd.s32 %s9, 1
    %s17 = ssub.s32 %s9, %s16
    %p18 = scmp.eq.s32.totalorder %s17, 0
    %s20 = sadd.s32 %s19, 1
    %s21 = scalar_select %p18, %s19, %s20
    %p24 = pneg %p18
    %p25 = scmp.eq.s32.totalorder %s9, 1
    %p26 = por %p24, %p25
    %p27 = scmp.ne.s32.totalorder %s19, %s22
    %p28 = scmp.eq.s32.totalorder %s9, 0
    %p29 = por %p27, %p28
    %p30 = scmp.ne.s32.totalorder %s19, %s22
    %p31 = scmp.eq.s32.totalorder %s14, 1
    %p32 = por %p30, %p31
    %p33 = scmp.ne.s32.totalorder %s22, %s23
    %p34 = scmp.eq.s32.totalorder %s14, 0
    %p35 = por %p33, %p34
    %p36 = scmp.ne.s32.totalorder %s22, %s23
    %p37 = scmp.eq.s32.totalorder %s15, 1
    %p38 = por %p36, %p37
    %p40 = scmp.ne.s32.totalorder %s23, %s39
    %p41 = scmp.eq.s32.totalorder %s15, 0
    %p42 = por %p40, %p41
    %s44 = sadd.s32 %s43, 1
    %p47 = scmp.eq.s32.totalorder %s9, 1
    %p48 = scmp.ne.s32.totalorder %s43, %s45
    %p49 = scmp.eq.s32.totalorder %s9, 0
    %p50 = por %p48, %p49
    %p51 = scmp.ne.s32.totalorder %s43, %s45
    %p52 = scmp.eq.s32.totalorder %s14, 1
    %p53 = por %p51, %p52
    %p54 = scmp.ne.s32.totalorder %s45, %s46
    %p55 = scmp.eq.s32.totalorder %s14, 0
    %p56 = por %p54, %p55
    %p57 = scmp.ne.s32.totalorder %s45, %s46
    %p58 = scmp.eq.s32.totalorder %s15, 1
    %p59 = por %p57, %p58
    %p61 = scmp.ne.s32.totalorder %s46, %s60
    %p62 = scmp.eq.s32.totalorder %s15, 0
    %p63 = por %p61, %p62
    %s64 = ssub.s32 %s9, %s16
    %p65 = scmp.eq.s32.totalorder %s64, 0
    %s67 = sadd.s32 %s66, 1
    %s68 = scalar_select %p65, %s66, %s67
    %p71 = pneg %p65
    %p72 = scmp.eq.s32.totalorder %s9, 1
    %p73 = por %p71, %p72
    %p74 = scmp.ne.s32.totalorder %s66, %s69
    %p75 = scmp.eq.s32.totalorder %s9, 0
    %p76 = por %p74, %p75
    %p77 = scmp.ne.s32.totalorder %s66, %s69
    %p78 = scmp.eq.s32.totalorder %s14, 1
    %p79 = por %p77, %p78
    %p80 = scmp.ne.s32.totalorder %s69, %s70
    %p81 = scmp.eq.s32.totalorder %s14, 0
    %p82 = por %p80, %p81
    %p83 = scmp.ne.s32.totalorder %s69, %s70
    %p84 = scmp.eq.s32.totalorder %s15, 1
    %p85 = por %p83, %p84
    %p87 = scmp.ne.s32.totalorder %s70, %s86
    %p88 = scmp.eq.s32.totalorder %s15, 0
    %p89 = por %p87, %p88
    %s90 = ssub.s32 %s9, %s16
    %p91 = scmp.eq.s32.totalorder %s90, 0
    %s93 = sadd.s32 %s92, 1
    %s94 = scalar_select %p91, %s92, %s93
    %p97 = pneg %p91
    %p98 = scmp.eq.s32.totalorder %s9, 1
    %p99 = por %p97, %p98
    %p100 = scmp.ne.s32.totalorder %s92, %s95
    %p101 = scmp.eq.s32.totalorder %s9, 0
    %p102 = por %p100, %p101
    %p103 = scmp.ne.s32.totalorder %s92, %s95
    %p104 = scmp.eq.s32.totalorder %s14, 1
    %p105 = por %p103, %p104
    %p106 = scmp.ne.s32.totalorder %s95, %s96
    %p107 = scmp.eq.s32.totalorder %s14, 0
    %p108 = por %p106, %p107
    %p109 = scmp.ne.s32.totalorder %s95, %s96
    %p110 = scmp.eq.s32.totalorder %s15, 1
    %p111 = por %p109, %p110
    %p113 = scmp.ne.s32.totalorder %s96, %s112
    %p114 = scmp.eq.s32.totalorder %s15, 0
    %p115 = por %p113, %p114
    %p116 = scmp.le.s32.totalorder 1, %s9
    %p117 = scmp.lt.s32.totalorder %s9, 3
    %p118 = pnand %p116, %p117
    %p119 = pneg %p118
    // Predicated region
    $region9: #{bilstm_forward.1} parent=5 // pred_check
      _
    $region10: #{bilstm_forward.1} parent=5 // pred_check_branch
      %121 = sbr.rel (%p118) target = $region12
    $region11: #{bilstm_forward.1} parent=5 // pred_region
      %s122 = ssub.s32 %s9, 1
      // Predicated region
      $region13: #{bilstm_forward.1} parent=11 // pred_check
        %p123 = pneg %p56
      $region14: #{bilstm_forward.1} parent=11 // pred_check_branch
        %125 = sbr.rel (%p123) target = $region16
      $region15: #{bilstm_forward.1} parent=11 // pred_region
        _
      $region16: #{bilstm_forward.1} parent=11 // pred_fallthru
        _
    $region12: #{bilstm_forward.1} parent=5 // pred_fallthru
      _
    %p126 = scmp.lt.s32.totalorder %s9, 2
    // Predicated region
    $region17: #{bilstm_forward.1} parent=5 // pred_check
      %p127 = pneg %p126
    $region18: #{bilstm_forward.1} parent=5 // pred_check_branch
      %129 = sbr.rel (%p127) target = $region20
    $region19: #{bilstm_forward.1} parent=5 // pred_region
      // Predicated region
      $region21: #{bilstm_forward.1} parent=19 // pred_check
        %p130 = pneg %p29
      $region22: #{bilstm_forward.1} parent=19 // pred_check_branch
        %132 = sbr.rel (%p130) target = $region24
      $region23: #{bilstm_forward.1} parent=19 // pred_region
        %p133 = scmp.lt.s32.totalorder %s9, 1
        %s134 = scalar_select %p133, %s9, 1
        %s135 = smul.addr %s134, 8
        %s136 = smul.addr %s135, 2
        %s137 = scalar_lea.vmem %s0, %s136
      $region24: #{bilstm_forward.1} parent=19 // pred_fallthru
        _
      // Predicated region
      $region25: #{bilstm_forward.1} parent=19 // pred_check
        %p138 = pneg %p76
      $region26: #{bilstm_forward.1} parent=19 // pred_check_branch
        %140 = sbr.rel (%p138) target = $region28
      $region27: #{bilstm_forward.1} parent=19 // pred_region
        %p141 = scmp.lt.s32.totalorder %s9, 1
        %s142 = scalar_select %p141, %s9, 1
        %s143 = smul.addr %s142, 4
        %s144 = smul.addr %s143, 8
        %s145 = scalar_lea.vmem %s2, %s144
      $region28: #{bilstm_forward.1} parent=19 // pred_fallthru
        _
    $region20: #{bilstm_forward.1} parent=5 // pred_fallthru
      _
    %p146 = scmp.le.s32.totalorder 1, %s9
    %p147 = scmp.lt.s32.totalorder %s9, 3
    %p148 = pnand %p146, %p147
    %p149 = pneg %p148
    // Predicated region
    $region29: #{bilstm_forward.1} parent=5 // pred_check
      _
    $region30: #{bilstm_forward.1} parent=5 // pred_check_branch
      %151 = sbr.rel (%p148) target = $region32
    $region31: #{bilstm_forward.1} parent=5 // pred_region
      %s152 = ssub.s32 %s9, 1
      %p153 = scmp.lt.s32.totalorder %s14, 1
      %s154 = scalar_select %p153, %s14, 1
      %s155 = smul.addr %s154, 8
      %s156 = smul.addr %s155, 2
      %s157 = scalar_lea.vmem %s0, %s156
      %p158 = pneg %p35
      %p159 = pneg %p32
      %p160 = pneg %p56
      %p161 = pneg %p53
      %p162 = scmp.lt.s32.totalorder %s14, 1
      %s163 = scalar_select %p162, %s14, 1
      %s164 = smul.addr %s163, 4
      %s165 = smul.addr %s164, 8
      %s166 = scalar_lea.vmem %s2, %s165
      %p167 = pneg %p82
      %p168 = pneg %p79
      %p169 = pneg %p108
      %p170 = pneg %p105
      %p171 = scmp.lt.s32.totalorder %s14, 1
      %s172 = scalar_select %p171, %s14, 1
      %s173 = smul.addr %s172, 2
      %s174 = scalar_lea.vmem %s3, %s173
      %p175 = scmp.lt.s32.totalorder %s14, 1
      %s176 = scalar_select %p175, %s14, 1
      %s177 = smul.addr %s176, 8
      %s178 = smul.addr %s177, 2
      %s179 = scalar_lea.vmem %s0, %s178
      %p180 = scmp.lt.s32.totalorder %s14, 1
      %s181 = scalar_select %p180, %s14, 1
      %s182 = smul.addr %s181, 4
      %s183 = smul.addr %s182, 8
      %s184 = scalar_lea.vmem %s2, %s183
      %p185 = scmp.lt.s32.totalorder %s14, 1
      %s186 = scalar_select %p185, %s14, 1
      %s187 = smul.addr %s186, 2
      %s188 = scalar_lea.vmem %s3, %s187
      %vm189 = vcmask 254976
      %190 = vst.msk [vmem:[#allocation2] sm:$0x3] %vm189, 0.0
      %191 = vst.msk [vmem:[#allocation3] sm:$0x3] %vm189, 0.0
      %192 = vst.msk [vmem:[%s188] sm:$0x3] %vm189, -inf
      %v193 = vld [vmem:[%s184] sm:$0xff]
      %v194 = vld [vmem:[%s184 + $0x8] sm:$0xff]
      %v195 = vld [vmem:[%s184 + $0x10] sm:$0xff]
      %v196 = vld [vmem:[%s184 + $0x18] sm:$0xff]
      %v197 = vld [vmem:[#allocation2] sm:$0x3]
      %v198 = vld [vmem:[%s179] sm:$0x3]
      %vm199 = vcmask 261120
      %v201 = vsel %vm199, %v197, 0
      %203 = vmatprep.subr.mxu0 0.0
      %204 = vmatpush1.msra.mxu0 %v193
      %205 = vmatprep.subr.mxu0 0.0
      %206 = vmatpush1.msra.mxu0 %v194
      %207 = vmatprep.subr.mxu0 0.0
      %208 = vmatpush1.msra.mxu0 %v195
      %209 = vmatprep.subr.mxu0 0.0
      %210 = vmatpush1.msra.mxu0 %v196
      %211 = vmatprep.subr.mxu0 0.0
      %212 = vmatpush1.msra.mxu0 0.0
      %213 = vmatprep.subr.mxu0 0.0
      %214 = vmatpush1.msra.mxu0 0.0
      %215 = vmatprep.subr.mxu0 0.0
      %216 = vmatpush1.msra.mxu0 0.0
      %217 = vmatprep.subr.mxu0 0.0
      %218 = vmatpush1.msra.mxu0 0.0
      %219 = vmatprep.subr.mxu0 0.0
      %220 = vmatpush1.msra.mxu0 0.0
      %221 = vmatprep.subr.mxu0 0.0
      %222 = vmatpush1.msra.mxu0 0.0
      %223 = vmatprep.subr.mxu0 0.0
      %224 = vmatpush1.msra.mxu0 0.0
      %225 = vmatprep.subr.mxu0 0.0
      %226 = vmatpush1.msra.mxu0 0.0
      %227 = vmatprep.subr.mxu0 0.0
      %228 = vmatpush1.msra.mxu0 0.0
      %229 = vmatprep.subr.mxu0 0.0
      %230 = vmatpush1.msra.mxu0 0.0
      %231 = vmatprep.subr.mxu0 0.0
      %232 = vmatpush1.msra.mxu0 0.0
      %233 = vmatprep.subr.mxu0 0.0
      %234 = vmatpush1.msra.mxu0 0.0
      %235 = vmatprep.subr.mxu0 0.0
      %236 = vmatpush1.msra.mxu0 0.0
      %237 = vmatprep.subr.mxu0 0.0
      %238 = vmatpush1.msra.mxu0 0.0
      %239 = vmatprep.subr.mxu0 0.0
      %240 = vmatpush1.msra.mxu0 0.0
      %241 = vmatprep.subr.mxu0 0.0
      %242 = vmatpush1.msra.mxu0 0.0
      %243 = vmatprep.subr.mxu0 0.0
      %244 = vmatpush1.msra.mxu0 0.0
      %245 = vmatprep.subr.mxu0 0.0
      %246 = vmatpush1.msra.mxu0 0.0
      %247 = vmatprep.subr.mxu0 0.0
      %248 = vmatpush1.msra.mxu0 0.0
      %249 = vmatprep.subr.mxu0 0.0
      %250 = vmatpush1.msra.mxu0 0.0
      %251 = vmatprep.subr.mxu0 0.0
      %252 = vmatpush1.msra.mxu0 0.0
      %253 = vmatprep.subr.mxu0 0.0
      %254 = vmatpush1.msra.mxu0 0.0
      %255 = vmatprep.subr.mxu0 0.0
      %256 = vmatpush1.msra.mxu0 0.0
      %257 = vmatprep.subr.mxu0 0.0
      %258 = vmatpush1.msra.mxu0 0.0
      %259 = vmatprep.subr.mxu0 0.0
      %260 = vmatpush1.msra.mxu0 0.0
      %261 = vmatprep.subr.mxu0 0.0
      %262 = vmatpush1.msra.mxu0 0.0
      %263 = vmatprep.subr.mxu0 0.0
      %264 = vmatpush1.msra.mxu0 0.0
      %265 = vmatprep.subr.mxu0 0.0
      %266 = vmatpush1.msra.mxu0 0.0
      %267 = vmatprep.mubr.f32.mxu0 0.0
      %268 = vmatmul.mubr.f32.gmra.mrb[0].mxu0 %v201
      %v269 = vpop.f32.mrb[0].mxu0
      %v270 = vadd.f32 0.0, %v269
      %v271 = vpop.f32.mrb[0].mxu0
      %272 = vdwg.mxu0
      %v273 = vadd.f32 %v198, %v270
      %v274 = vxor.u32 %v273, 2147483648
      %v275 = vmul.f32 %v274, 1.442695
      %v276 = vpow.pop %v275
      %v277 = vadd.f32 %v276, 1.0
      %v278 = vrcp.pop %v277
      %v279 = vmul.f32 1.0, %v278
      %v280 = vtanh.pop %v273
      %v281 = vld [vmem:[#allocation3] sm:$0x3]
      %283 = vrot.lane.b32.xlu0 %v281, 32
      %v284 = vpop.permute.xlu0 %283
      %v286 = vmul.f32 %v279, %v284
      %288 = vrot.lane.b32.xlu0 %v280, 32
      %v289 = vpop.permute.xlu0 %288
      %v291 = vmul.f32 %v279, %v289
      %293 = vrot.lane.b32.xlu0 %v291, 32
      %v294 = vpop.permute.xlu0 %293
      %v296 = vadd.f32 %v286, %v294
      %v297 = vtanh.pop %v296
      %299 = vrot.lane.b32.xlu0 %v297, 32
      %v300 = vpop.permute.xlu0 %299
      %v302 = vmul.f32 %v279, %v300
      %304 = vrot.lane.b32.xlu0 %v296, 96
      %v305 = vpop.permute.xlu0 %304
      %307 = vst.msk [vmem:[#allocation3] sm:$0x3] %vm189, %v305
      %309 = vrot.lane.b32.xlu0 %v302, 64
      %v310 = vpop.permute.xlu0 %309
      %312 = vst.msk [vmem:[#allocation2] sm:$0x3] %vm189, %v310
      %v313 = vld [vmem:[%s188] sm:$0x3]
      %v314 = vld [vmem:[%s1] sm:$0x3]
      %316 = vset.pattern.permute.xlu0 0
      %317 = vperm.xlu0 %316, %v314
      %v318 = vpop.permute.xlu0 %317
      %v320 = vadd.f32 %v302, %v318
      %322 = vrot.lane.b32.xlu0 %v320, 64
      %v323 = vpop.permute.xlu0 %322
      %v325 = vmax.f32 %v313, %v323
      %326 = vst.msk [vmem:[%s188] sm:$0x3] %vm189, %v325
      %v327 = vld [vmem:[#allocation2] sm:$0x3]
      %s328 = scalar_lea.vmem %s179, 2
      %v329 = vld [vmem:[%s328] sm:$0x3]
      %v331 = vsel %vm199, %v327, 0
      %333 = vmatprep.subr.mxu0 0.0
      %334 = vmatpush1.msra.mxu0 %v193
      %335 = vmatprep.subr.mxu0 0.0
      %336 = vmatpush1.msra.mxu0 %v194
      %337 = vmatprep.subr.mxu0 0.0
      %338 = vmatpush1.msra.mxu0 %v195
      %339 = vmatprep.subr.mxu0 0.0
      %340 = vmatpush1.msra.mxu0 %v196
      %341 = vmatprep.subr.mxu0 0.0
      %342 = vmatpush1.msra.mxu0 0.0
      %343 = vmatprep.subr.mxu0 0.0
      %344 = vmatpush1.msra.mxu0 0.0
      %345 = vmatprep.subr.mxu0 0.0
      %346 = vmatpush1.msra.mxu0 0.0
      %347 = vmatprep.subr.mxu0 0.0
      %348 = vmatpush1.msra.mxu0 0.0
      %349 = vmatprep.subr.mxu0 0.0
      %350 = vmatpush1.msra.mxu0 0.0
      %351 = vmatprep.subr.mxu0 0.0
      %352 = vmatpush1.msra.mxu0 0.0
      %353 = vmatprep.subr.mxu0 0.0
      %354 = vmatpush1.msra.mxu0 0.0
      %355 = vmatprep.subr.mxu0 0.0
      %356 = vmatpush1.msra.mxu0 0.0
      %357 = vmatprep.subr.mxu0 0.0
      %358 = vmatpush1.msra.mxu0 0.0
      %359 = vmatprep.subr.mxu0 0.0
      %360 = vmatpush1.msra.mxu0 0.0
      %361 = vmatprep.subr.mxu0 0.0
      %362 = vmatpush1.msra.mxu0 0.0
      %363 = vmatprep.subr.mxu0 0.0
      %364 = vmatpush1.msra.mxu0 0.0
      %365 = vmatprep.subr.mxu0 0.0
      %366 = vmatpush1.msra.mxu0 0.0
      %367 = vmatprep.subr.mxu0 0.0
      %368 = vmatpush1.msra.mxu0 0.0
      %369 = vmatprep.subr.mxu0 0.0
      %370 = vmatpush1.msra.mxu0 0.0
      %371 = vmatprep.subr.mxu0 0.0
      %372 = vmatpush1.msra.mxu0 0.0
      %373 = vmatprep.subr.mxu0 0.0
      %374 = vmatpush1.msra.mxu0 0.0
      %375 = vmatprep.subr.mxu0 0.0
      %376 = vmatpush1.msra.mxu0 0.0
      %377 = vmatprep.subr.mxu0 0.0
      %378 = vmatpush1.msra.mxu0 0.0
      %379 = vmatprep.subr.mxu0 0.0
      %380 = vmatpush1.msra.mxu0 0.0
      %381 = vmatprep.subr.mxu0 0.0
      %382 = vmatpush1.msra.mxu0 0.0
      %383 = vmatprep.subr.mxu0 0.0
      %384 = vmatpush1.msra.mxu0 0.0
      %385 = vmatprep.subr.mxu0 0.0
      %386 = vmatpush1.msra.mxu0 0.0
      %387 = vmatprep.subr.mxu0 0.0
      %388 = vmatpush1.msra.mxu0 0.0
      %389 = vmatprep.subr.mxu0 0.0
      %390 = vmatpush1.msra.mxu0 0.0
      %391 = vmatprep.subr.mxu0 0.0
      %392 = vmatpush1.msra.mxu0 0.0
      %393 = vmatprep.subr.mxu0 0.0
      %394 = vmatpush1.msra.mxu0 0.0
      %395 = vmatprep.subr.mxu0 0.0
      %396 = vmatpush1.msra.mxu0 0.0
      %397 = vmatprep.mubr.f32.mxu0 0.0
      %398 = vmatmul.mubr.f32.gmra.mrb[0].mxu0 %v331
      %v399 = vpop.f32.mrb[0].mxu0
      %v400 = vadd.f32 0.0, %v399
      %v401 = vpop.f32.mrb[0].mxu0
      %402 = vdwg.mxu0
      %v403 = vadd.f32 %v329, %v400
      %v404 = vxor.u32 %v403, 2147483648
      %v405 = vmul.f32 %v404, 1.442695
      %v406 = vpow.pop %v405
      %v407 = vadd.f32 %v406, 1.0
      %v408 = vrcp.pop %v407
      %v409 = vmul.f32 1.0, %v408
      %v410 = vtanh.pop %v403
      %v411 = vld [vmem:[#allocation3] sm:$0x3]
      %413 = vrot.lane.b32.xlu0 %v411, 32
      %v414 = vpop.permute.xlu0 %413
      %v416 = vmul.f32 %v409, %v414
      %418 = vrot.lane.b32.xlu0 %v410, 32
      %v419 = vpop.permute.xlu0 %418
      %v421 = vmul.f32 %v409, %v419
      %423 = vrot.lane.b32.xlu0 %v421, 32
      %v424 = vpop.permute.xlu0 %423
      %v426 = vadd.f32 %v416, %v424
      %v427 = vtanh.pop %v426
      %429 = vrot.lane.b32.xlu0 %v427, 32
      %v430 = vpop.permute.xlu0 %429
      %v432 = vmul.f32 %v409, %v430
      %434 = vrot.lane.b32.xlu0 %v426, 96
      %v435 = vpop.permute.xlu0 %434
      %437 = vst.msk [vmem:[#allocation3] sm:$0x3] %vm189, %v435
      %439 = vrot.lane.b32.xlu0 %v432, 64
      %v440 = vpop.permute.xlu0 %439
      %442 = vst.msk [vmem:[#allocation2] sm:$0x3] %vm189, %v440
      %v443 = vld [vmem:[%s188] sm:$0x3]
      %s444 = scalar_lea.vmem %s1, 2
      %v445 = vld [vmem:[%s444] sm:$0x3]
      %447 = vset.pattern.permute.xlu0 0
      %448 = vperm.xlu0 %447, %v445
      %v449 = vpop.permute.xlu0 %448
      %v451 = vadd.f32 %v432, %v449
      %453 = vrot.lane.b32.xlu0 %v451, 64
      %v454 = vpop.permute.xlu0 %453
      %v456 = vmax.f32 %v443, %v454
      %457 = vst.msk [vmem:[%s188] sm:$0x3] %vm189, %v456
      %v458 = vld [vmem:[#allocation2] sm:$0x3]
      %s459 = scalar_lea.vmem %s179, 4
      %v460 = vld [vmem:[%s459] sm:$0x3]
      %v462 = vsel %vm199, %v458, 0
      %464 = vmatprep.subr.mxu0 0.0
      %465 = vmatpush1.msra.mxu0 %v193
      %466 = vmatprep.subr.mxu0 0.0
      %467 = vmatpush1.msra.mxu0 %v194
      %468 = vmatprep.subr.mxu0 0.0
      %469 = vmatpush1.msra.mxu0 %v195
      %470 = vmatprep.subr.mxu0 0.0
      %471 = vmatpush1.msra.mxu0 %v196
      %472 = vmatprep.subr.mxu0 0.0
      %473 = vmatpush1.msra.mxu0 0.0
      %474 = vmatprep.subr.mxu0 0.0
      %475 = vmatpush1.msra.mxu0 0.0
      %476 = vmatprep.subr.mxu0 0.0
      %477 = vmatpush1.msra.mxu0 0.0
      %478 = vmatprep.subr.mxu0 0.0
      %479 = vmatpush1.msra.mxu0 0.0
      %480 = vmatprep.subr.mxu0 0.0
      %481 = vmatpush1.msra.mxu0 0.0
      %482 = vmatprep.subr.mxu0 0.0
      %483 = vmatpush1.msra.mxu0 0.0
      %484 = vmatprep.subr.mxu0 0.0
      %485 = vmatpush1.msra.mxu0 0.0
      %486 = vmatprep.subr.mxu0 0.0
      %487 = vmatpush1.msra.mxu0 0.0
      %488 = vmatprep.subr.mxu0 0.0
      %489 = vmatpush1.msra.mxu0 0.0
      %490 = vmatprep.subr.mxu0 0.0
      %491 = vmatpush1.msra.mxu0 0.0
      %492 = vmatprep.subr.mxu0 0.0
      %493 = vmatpush1.msra.mxu0 0.0
      %494 = vmatprep.subr.mxu0 0.0
      %495 = vmatpush1.msra.mxu0 0.0
      %496 = vmatprep.subr.mxu0 0.0
      %497 = vmatpush1.msra.mxu0 0.0
      %498 = vmatprep.subr.mxu0 0.0
      %499 = vmatpush1.msra.mxu0 0.0
      %500 = vmatprep.subr.mxu0 0.0
      %501 = vmatpush1.msra.mxu0 0.0
      %502 = vmatprep.subr.mxu0 0.0
      %503 = vmatpush1.msra.mxu0 0.0
      %504 = vmatprep.subr.mxu0 0.0
      %505 = vmatpush1.msra.mxu0 0.0
      %506 = vmatprep.subr.mxu0 0.0
      %507 = vmatpush1.msra.mxu0 0.0
      %508 = vmatprep.subr.mxu0 0.0
      %509 = vmatpush1.msra.mxu0 0.0
      %510 = vmatprep.subr.mxu0 0.0
      %511 = vmatpush1.msra.mxu0 0.0
      %512 = vmatprep.subr.mxu0 0.0
      %513 = vmatpush1.msra.mxu0 0.0
      %514 = vmatprep.subr.mxu0 0.0
      %515 = vmatpush1.msra.mxu0 0.0
      %516 = vmatprep.subr.mxu0 0.0
      %517 = vmatpush1.msra.mxu0 0.0
      %518 = vmatprep.subr.mxu0 0.0
      %519 = vmatpush1.msra.mxu0 0.0
      %520 = vmatprep.subr.mxu0 0.0
      %521 = vmatpush1.msra.mxu0 0.0
      %522 = vmatprep.subr.mxu0 0.0
      %523 = vmatpush1.msra.mxu0 0.0
      %524 = vmatprep.subr.mxu0 0.0
      %525 = vmatpush1.msra.mxu0 0.0
      %526 = vmatprep.subr.mxu0 0.0
      %527 = vmatpush1.msra.mxu0 0.0
      %528 = vmatprep.mubr.f32.mxu0 0.0
      %529 = vmatmul.mubr.f32.gmra.mrb[0].mxu0 %v462
      %v530 = vpop.f32.mrb[0].mxu0
      %v531 = vadd.f32 0.0, %v530
      %v532 = vpop.f32.mrb[0].mxu0
      %533 = vdwg.mxu0
      %v534 = vadd.f32 %v460, %v531
      %v535 = vxor.u32 %v534, 2147483648
      %v536 = vmul.f32 %v535, 1.442695
      %v537 = vpow.pop %v536
      %v538 = vadd.f32 %v537, 1.0
      %v539 = vrcp.pop %v538
      %v540 = vmul.f32 1.0, %v539
      %v541 = vtanh.pop %v534
      %v542 = vld [vmem:[#allocation3] sm:$0x3]
      %544 = vrot.lane.b32.xlu0 %v542, 32
      %v545 = vpop.permute.xlu0 %544
      %v547 = vmul.f32 %v540, %v545
      %549 = vrot.lane.b32.xlu0 %v541, 32
      %v550 = vpop.permute.xlu0 %549
      %v552 = vmul.f32 %v540, %v550
      %554 = vrot.lane.b32.xlu0 %v552, 32
      %v555 = vpop.permute.xlu0 %554
      %v557 = vadd.f32 %v547, %v555
      %v558 = vtanh.pop %v557
      %560 = vrot.lane.b32.xlu0 %v558, 32
      %v561 = vpop.permute.xlu0 %560
      %v563 = vmul.f32 %v540, %v561
      %565 = vrot.lane.b32.xlu0 %v557, 96
      %v566 = vpop.permute.xlu0 %565
      %568 = vst.msk [vmem:[#allocation3] sm:$0x3] %vm189, %v566
      %570 = vrot.lane.b32.xlu0 %v563, 64
      %v571 = vpop.permute.xlu0 %570
      %573 = vst.msk [vmem:[#allocation2] sm:$0x3] %vm189, %v571
      %v574 = vld [vmem:[%s188] sm:$0x3]
      %s575 = scalar_lea.vmem %s1, 4
      %v576 = vld [vmem:[%s575] sm:$0x3]
      %578 = vset.pattern.permute.xlu0 0
      %579 = vperm.xlu0 %578, %v576
      %v580 = vpop.permute.xlu0 %579
      %v582 = vadd.f32 %v563, %v580
      %584 = vrot.lane.b32.xlu0 %v582, 64
      %v585 = vpop.permute.xlu0 %584
      %v587 = vmax.f32 %v574, %v585
      %588 = vst.msk [vmem:[%s188] sm:$0x3] %vm189, %v587
      %v589 = vld [vmem:[#allocation2] sm:$0x3]
      %s590 = scalar_lea.vmem %s179, 6
      %v591 = vld [vmem:[%s590] sm:$0x3]
      %v593 = vsel %vm199, %v589, 0
      %595 = vmatprep.subr.mxu0 0.0
      %596 = vmatpush1.msra.mxu0 %v193
      %597 = vmatprep.subr.mxu0 0.0
      %598 = vmatpush1.msra.mxu0 %v194
      %599 = vmatprep.subr.mxu0 0.0
      %600 = vmatpush1.msra.mxu0 %v195
      %601 = vmatprep.subr.mxu0 0.0
      %602 = vmatpush1.msra.mxu0 %v196
      %603 = vmatprep.subr.mxu0 0.0
      %604 = vmatpush1.msra.mxu0 0.0
      %605 = vmatprep.subr.mxu0 0.0
      %606 = vmatpush1.msra.mxu0 0.0
      %607 = vmatprep.subr.mxu0 0.0
      %608 = vmatpush1.msra.mxu0 0.0
      %609 = vmatprep.subr.mxu0 0.0
      %610 = vmatpush1.msra.mxu0 0.0
      %611 = vmatprep.subr.mxu0 0.0
      %612 = vmatpush1.msra.mxu0 0.0
      %613 = vmatprep.subr.mxu0 0.0
      %614 = vmatpush1.msra.mxu0 0.0
      %615 = vmatprep.subr.mxu0 0.0
      %616 = vmatpush1.msra.mxu0 0.0
      %617 = vmatprep.subr.mxu0 0.0
      %618 = vmatpush1.msra.mxu0 0.0
      %619 = vmatprep.subr.mxu0 0.0
      %620 = vmatpush1.msra.mxu0 0.0
      %621 = vmatprep.subr.mxu0 0.0
      %622 = vmatpush1.msra.mxu0 0.0
      %623 = vmatprep.subr.mxu0 0.0
      %624 = vmatpush1.msra.mxu0 0.0
      %625 = vmatprep.subr.mxu0 0.0
      %626 = vmatpush1.msra.mxu0 0.0
      %627 = vmatprep.subr.mxu0 0.0
      %628 = vmatpush1.msra.mxu0 0.0
      %629 = vmatprep.subr.mxu0 0.0
      %630 = vmatpush1.msra.mxu0 0.0
      %631 = vmatprep.subr.mxu0 0.0
      %632 = vmatpush1.msra.mxu0 0.0
      %633 = vmatprep.subr.mxu0 0.0
      %634 = vmatpush1.msra.mxu0 0.0
      %635 = vmatprep.subr.mxu0 0.0
      %636 = vmatpush1.msra.mxu0 0.0
      %637 = vmatprep.subr.mxu0 0.0
      %638 = vmatpush1.msra.mxu0 0.0
      %639 = vmatprep.subr.mxu0 0.0
      %640 = vmatpush1.msra.mxu0 0.0
      %641 = vmatprep.subr.mxu0 0.0
      %642 = vmatpush1.msra.mxu0 0.0
      %643 = vmatprep.subr.mxu0 0.0
      %644 = vmatpush1.msra.mxu0 0.0
      %645 = vmatprep.subr.mxu0 0.0
      %646 = vmatpush1.msra.mxu0 0.0
      %647 = vmatprep.subr.mxu0 0.0
      %648 = vmatpush1.msra.mxu0 0.0
      %649 = vmatprep.subr.mxu0 0.0
      %650 = vmatpush1.msra.mxu0 0.0
      %651 = vmatprep.subr.mxu0 0.0
      %652 = vmatpush1.msra.mxu0 0.0
      %653 = vmatprep.subr.mxu0 0.0
      %654 = vmatpush1.msra.mxu0 0.0
      %655 = vmatprep.subr.mxu0 0.0
      %656 = vmatpush1.msra.mxu0 0.0
      %657 = vmatprep.subr.mxu0 0.0
      %658 = vmatpush1.msra.mxu0 0.0
      %659 = vmatprep.mubr.f32.mxu0 0.0
      %660 = vmatmul.mubr.f32.gmra.mrb[0].mxu0 %v593
      %v661 = vpop.f32.mrb[0].mxu0
      %v662 = vadd.f32 0.0, %v661
      %v663 = vpop.f32.mrb[0].mxu0
      %664 = vdwg.mxu0
      %v665 = vadd.f32 %v591, %v662
      %v666 = vxor.u32 %v665, 2147483648
      %v667 = vmul.f32 %v666, 1.442695
      %v668 = vpow.pop %v667
      %v669 = vadd.f32 %v668, 1.0
      %v670 = vrcp.pop %v669
      %v671 = vmul.f32 1.0, %v670
      %v672 = vtanh.pop %v665
      %v673 = vld [vmem:[#allocation3] sm:$0x3]
      %675 = vrot.lane.b32.xlu0 %v673, 32
      %v676 = vpop.permute.xlu0 %675
      %v678 = vmul.f32 %v671, %v676
      %680 = vrot.lane.b32.xlu0 %v672, 32
      %v681 = vpop.permute.xlu0 %680
      %v683 = vmul.f32 %v671, %v681
      %685 = vrot.lane.b32.xlu0 %v683, 32
      %v686 = vpop.permute.xlu0 %685
      %v688 = vadd.f32 %v678, %v686
      %v689 = vtanh.pop %v688
      %691 = vrot.lane.b32.xlu0 %v689, 32
      %v692 = vpop.permute.xlu0 %691
      %v694 = vmul.f32 %v671, %v692
      %696 = vrot.lane.b32.xlu0 %v688, 96
      %v697 = vpop.permute.xlu0 %696
      %699 = vst.msk [vmem:[#allocation3] sm:$0x3] %vm189, %v697
      %701 = vrot.lane.b32.xlu0 %v694, 64
      %v702 = vpop.permute.xlu0 %701
      %704 = vst.msk [vmem:[#allocation2] sm:$0x3] %vm189, %v702
      %v705 = vld [vmem:[%s188] sm:$0x3]
      %s706 = scalar_lea.vmem %s1, 6
      %v707 = vld [vmem:[%s706] sm:$0x3]
      %709 = vset.pattern.permute.xlu0 0
      %710 = vperm.xlu0 %709, %v707
      %v711 = vpop.permute.xlu0 %710
      %v713 = vadd.f32 %v694, %v711
      %715 = vrot.lane.b32.xlu0 %v713, 64
      %v716 = vpop.permute.xlu0 %715
      %v718 = vmax.f32 %v705, %v716
      %719 = vst.msk [vmem:[%s188] sm:$0x3] %vm189, %v718
      %v720 = vld [vmem:[#allocation2] sm:$0x3]
      %s721 = scalar_lea.vmem %s179, 8
      %v722 = vld [vmem:[%s721] sm:$0x3]
      %v724 = vsel %vm199, %v720, 0
      %726 = vmatprep.subr.mxu0 0.0
      %727 = vmatpush1.msra.mxu0 %v193
      %728 = vmatprep.subr.mxu0 0.0
      %729 = vmatpush1.msra.mxu0 %v194
      %730 = vmatprep.subr.mxu0 0.0
      %731 = vmatpush1.msra.mxu0 %v195
      %732 = vmatprep.subr.mxu0 0.0
      %733 = vmatpush1.msra.mxu0 %v196
      %734 = vmatprep.subr.mxu0 0.0
      %735 = vmatpush1.msra.mxu0 0.0
      %736 = vmatprep.subr.mxu0 0.0
      %737 = vmatpush1.msra.mxu0 0.0
      %738 = vmatprep.subr.mxu0 0.0
      %739 = vmatpush1.msra.mxu0 0.0
      %740 = vmatprep.subr.mxu0 0.0
      %741 = vmatpush1.msra.mxu0 0.0
      %742 = vmatprep.subr.mxu0 0.0
      %743 = vmatpush1.msra.mxu0 0.0
      %744 = vmatprep.subr.mxu0 0.0
      %745 = vmatpush1.msra.mxu0 0.0
      %746 = vmatprep.subr.mxu0 0.0
      %747 = vmatpush1.msra.mxu0 0.0
      %748 = vmatprep.subr.mxu0 0.0
      %749 = vmatpush1.msra.mxu0 0.0
      %750 = vmatprep.subr.mxu0 0.0
      %751 = vmatpush1.msra.mxu0 0.0
      %752 = vmatprep.subr.mxu0 0.0
      %753 = vmatpush1.msra.mxu0 0.0
      %754 = vmatprep.subr.mxu0 0.0
      %755 = vmatpush1.msra.mxu0 0.0
      %756 = vmatprep.subr.mxu0 0.0
      %757 = vmatpush1.msra.mxu0 0.0
      %758 = vmatprep.subr.mxu0 0.0
      %759 = vmatpush1.msra.mxu0 0.0
      %760 = vmatprep.subr.mxu0 0.0
      %761 = vmatpush1.msra.mxu0 0.0
      %762 = vmatprep.subr.mxu0 0.0
      %763 = vmatpush1.msra.mxu0 0.0
      %764 = vmatprep.subr.mxu0 0.0
      %765 = vmatpush1.msra.mxu0 0.0
      %766 = vmatprep.subr.mxu0 0.0
      %767 = vmatpush1.msra.mxu0 0.0
      %768 = vmatprep.subr.mxu0 0.0
      %769 = vmatpush1.msra.mxu0 0.0
      %770 = vmatprep.subr.mxu0 0.0
      %771 = vmatpush1.msra.mxu0 0.0
      %772 = vmatprep.subr.mxu0 0.0
      %773 = vmatpush1.msra.mxu0 0.0
      %774 = vmatprep.subr.mxu0 0.0
      %775 = vmatpush1.msra.mxu0 0.0
      %776 = vmatprep.subr.mxu0 0.0
      %777 = vmatpush1.msra.mxu0 0.0
      %778 = vmatprep.subr.mxu0 0.0
      %779 = vmatpush1.msra.mxu0 0.0
      %780 = vmatprep.subr.mxu0 0.0
      %781 = vmatpush1.msra.mxu0 0.0
      %782 = vmatprep.subr.mxu0 0.0
      %783 = vmatpush1.msra.mxu0 0.0
      %784 = vmatprep.subr.mxu0 0.0
      %785 = vmatpush1.msra.mxu0 0.0
      %786 = vmatprep.subr.mxu0 0.0
      %787 = vmatpush1.msra.mxu0 0.0
      %788 = vmatprep.subr.mxu0 0.0
      %789 = vmatpush1.msra.mxu0 0.0
      %790 = vmatprep.mubr.f32.mxu0 0.0
      %791 = vmatmul.mubr.f32.gmra.mrb[0].mxu0 %v724
      %v792 = vpop.f32.mrb[0].mxu0
      %v793 = vadd.f32 0.0, %v792
      %v794 = vpop.f32.mrb[0].mxu0
      %795 = vdwg.mxu0
      %v796 = vadd.f32 %v722, %v793
      %v797 = vxor.u32 %v796, 2147483648
      %v798 = vmul.f32 %v797, 1.442695
      %v799 = vpow.pop %v798
      %v800 = vadd.f32 %v799, 1.0
      %v801 = vrcp.pop %v800
      %v802 = vmul.f32 1.0, %v801
      %v803 = vtanh.pop %v796
      %v804 = vld [vmem:[#allocation3] sm:$0x3]
      %806 = vrot.lane.b32.xlu0 %v804, 32
      %v807 = vpop.permute.xlu0 %806
      %v809 = vmul.f32 %v802, %v807
      %811 = vrot.lane.b32.xlu0 %v803, 32
      %v812 = vpop.permute.xlu0 %811
      %v814 = vmul.f32 %v802, %v812
      %816 = vrot.lane.b32.xlu0 %v814, 32
      %v817 = vpop.permute.xlu0 %816
      %v819 = vadd.f32 %v809, %v817
      %v820 = vtanh.pop %v819
      %822 = vrot.lane.b32.xlu0 %v820, 32
      %v823 = vpop.permute.xlu0 %822
      %v825 = vmul.f32 %v802, %v823
      %827 = vrot.lane.b32.xlu0 %v819, 96
      %v828 = vpop.permute.xlu0 %827
      %830 = vst.msk [vmem:[#allocation3] sm:$0x3] %vm189, %v828
      %832 = vrot.lane.b32.xlu0 %v825, 64
      %v833 = vpop.permute.xlu0 %832
      %835 = vst.msk [vmem:[#allocation2] sm:$0x3] %vm189, %v833
      %v836 = vld [vmem:[%s188] sm:$0x3]
      %s837 = scalar_lea.vmem %s1, 8
      %v838 = vld [vmem:[%s837] sm:$0x3]
      %840 = vset.pattern.permute.xlu0 0
      %841 = vperm.xlu0 %840, %v838
      %v842 = vpop.permute.xlu0 %841
      %v844 = vadd.f32 %v825, %v842
      %846 = vrot.lane.b32.xlu0 %v844, 64
      %v847 = vpop.permute.xlu0 %846
      %v849 = vmax.f32 %v836, %v847
      %850 = vst.msk [vmem:[%s188] sm:$0x3] %vm189, %v849
      %v851 = vld [vmem:[#allocation2] sm:$0x3]
      %s852 = scalar_lea.vmem %s179, 10
      %v853 = vld [vmem:[%s852] sm:$0x3]
      %v855 = vsel %vm199, %v851, 0
      %857 = vmatprep.subr.mxu0 0.0
      %858 = vmatpush1.msra.mxu0 %v193
      %859 = vmatprep.subr.mxu0 0.0
      %860 = vmatpush1.msra.mxu0 %v194
      %861 = vmatprep.subr.mxu0 0.0
      %862 = vmatpush1.msra.mxu0 %v195
      %863 = vmatprep.subr.mxu0 0.0
      %864 = vmatpush1.msra.mxu0 %v196
      %865 = vmatprep.subr.mxu0 0.0
      %866 = vmatpush1.msra.mxu0 0.0
      %867 = vmatprep.subr.mxu0 0.0
      %868 = vmatpush1.msra.mxu0 0.0
      %869 = vmatprep.subr.mxu0 0.0
      %870 = vmatpush1.msra.mxu0 0.0
      %871 = vmatprep.subr.mxu0 0.0
      %872 = vmatpush1.msra.mxu0 0.0
      %873 = vmatprep.subr.mxu0 0.0
      %874 = vmatpush1.msra.mxu0 0.0
      %875 = vmatprep.subr.mxu0 0.0
      %876 = vmatpush1.msra.mxu0 0.0
      %877 = vmatprep.subr.mxu0 0.0
      %878 = vmatpush1.msra.mxu0 0.0
      %879 = vmatprep.subr.mxu0 0.0
      %880 = vmatpush1.msra.mxu0 0.0
      %881 = vmatprep.subr.mxu0 0.0
      %882 = vmatpush1.msra.mxu0 0.0
      %883 = vmatprep.subr.mxu0 0.0
      %884 = vmatpush1.msra.mxu0 0.0
      %885 = vmatprep.subr.mxu0 0.0
      %886 = vmatpush1.msra.mxu0 0.0
      %887 = vmatprep.subr.mxu0 0.0
      %888 = vmatpush1.msra.mxu0 0.0
      %889 = vmatprep.subr.mxu0 0.0
      %890 = vmatpush1.msra.mxu0 0.0
      %891 = vmatprep.subr.mxu0 0.0
      %892 = vmatpush1.msra.mxu0 0.0
      %893 = vmatprep.subr.mxu0 0.0
      %894 = vmatpush1.msra.mxu0 0.0
      %895 = vmatprep.subr.mxu0 0.0
      %896 = vmatpush1.msra.mxu0 0.0
      %897 = vmatprep.subr.mxu0 0.0
      %898 = vmatpush1.msra.mxu0 0.0
      %899 = vmatprep.subr.mxu0 0.0
      %900 = vmatpush1.msra.mxu0 0.0
      %901 = vmatprep.subr.mxu0 0.0
      %902 = vmatpush1.msra.mxu0 0.0
      %903 = vmatprep.subr.mxu0 0.0
      %904 = vmatpush1.msra.mxu0 0.0
      %905 = vmatprep.subr.mxu0 0.0
      %906 = vmatpush1.msra.mxu0 0.0
      %907 = vmatprep.subr.mxu0 0.0
      %908 = vmatpush1.msra.mxu0 0.0
      %909 = vmatprep.subr.mxu0 0.0
      %910 = vmatpush1.msra.mxu0 0.0
      %911 = vmatprep.subr.mxu0 0.0
      %912 = vmatpush1.msra.mxu0 0.0
      %913 = vmatprep.subr.mxu0 0.0
      %914 = vmatpush1.msra.mxu0 0.0
      %915 = vmatprep.subr.mxu0 0.0
      %916 = vmatpush1.msra.mxu0 0.0
      %917 = vmatprep.subr.mxu0 0.0
      %918 = vmatpush1.msra.mxu0 0.0
      %919 = vmatprep.subr.mxu0 0.0
      %920 = vmatpush1.msra.mxu0 0.0
      %921 = vmatprep.mubr.f32.mxu0 0.0
      %922 = vmatmul.mubr.f32.gmra.mrb[0].mxu0 %v855
      %v923 = vpop.f32.mrb[0].mxu0
      %v924 = vadd.f32 0.0, %v923
      %v925 = vpop.f32.mrb[0].mxu0
      %926 = vdwg.mxu0
      %v927 = vadd.f32 %v853, %v924
      %v928 = vxor.u32 %v927, 2147483648
      %v929 = vmul.f32 %v928, 1.442695
      %v930 = vpow.pop %v929
      %v931 = vadd.f32 %v930, 1.0
      %v932 = vrcp.pop %v931
      %v933 = vmul.f32 1.0, %v932
      %v934 = vtanh.pop %v927
      %v935 = vld [vmem:[#allocation3] sm:$0x3]
      %937 = vrot.lane.b32.xlu0 %v935, 32
      %v938 = vpop.permute.xlu0 %937
      %v940 = vmul.f32 %v933, %v938
      %942 = vrot.lane.b32.xlu0 %v934, 32
      %v943 = vpop.permute.xlu0 %942
      %v945 = vmul.f32 %v933, %v943
      %947 = vrot.lane.b32.xlu0 %v945, 32
      %v948 = vpop.permute.xlu0 %947
      %v950 = vadd.f32 %v940, %v948
      %v951 = vtanh.pop %v950
      %953 = vrot.lane.b32.xlu0 %v951, 32
      %v954 = vpop.permute.xlu0 %953
      %v956 = vmul.f32 %v933, %v954
      %958 = vrot.lane.b32.xlu0 %v950, 96
      %v959 = vpop.permute.xlu0 %958
      %961 = vst.msk [vmem:[#allocation3] sm:$0x3] %vm189, %v959
      %963 = vrot.lane.b32.xlu0 %v956, 64
      %v964 = vpop.permute.xlu0 %963
      %966 = vst.msk [vmem:[#allocation2] sm:$0x3] %vm189, %v964
      %v967 = vld [vmem:[%s188] sm:$0x3]
      %s968 = scalar_lea.vmem %s1, 10
      %v969 = vld [vmem:[%s968] sm:$0x3]
      %971 = vset.pattern.permute.xlu0 0
      %972 = vperm.xlu0 %971, %v969
      %v973 = vpop.permute.xlu0 %972
      %v975 = vadd.f32 %v956, %v973
      %977 = vrot.lane.b32.xlu0 %v975, 64
      %v978 = vpop.permute.xlu0 %977
      %v980 = vmax.f32 %v967, %v978
      %981 = vst.msk [vmem:[%s188] sm:$0x3] %vm189, %v980
      %v982 = vld [vmem:[#allocation2] sm:$0x3]
      %s983 = scalar_lea.vmem %s179, 12
      %v984 = vld [vmem:[%s983] sm:$0x3]
      %v986 = vsel %vm199, %v982, 0
      %988 = vmatprep.subr.mxu0 0.0
      %989 = vmatpush1.msra.mxu0 %v193
      %990 = vmatprep.subr.mxu0 0.0
      %991 = vmatpush1.msra.mxu0 %v194
      %992 = vmatprep.subr.mxu0 0.0
      %993 = vmatpush1.msra.mxu0 %v195
      %994 = vmatprep.subr.mxu0 0.0
      %995 = vmatpush1.msra.mxu0 %v196
      %996 = vmatprep.subr.mxu0 0.0
      %997 = vmatpush1.msra.mxu0 0.0
      %998 = vmatprep.subr.mxu0 0.0
      %999 = vmatpush1.msra.mxu0 0.0
      %1000 = vmatprep.subr.mxu0 0.0
      %1001 = vmatpush1.msra.mxu0 0.0
      %1002 = vmatprep.subr.mxu0 0.0
      %1003 = vmatpush1.msra.mxu0 0.0
      %1004 = vmatprep.subr.mxu0 0.0
      %1005 = vmatpush1.msra.mxu0 0.0
      %1006 = vmatprep.subr.mxu0 0.0
      %1007 = vmatpush1.msra.mxu0 0.0
      %1008 = vmatprep.subr.mxu0 0.0
      %1009 = vmatpush1.msra.mxu0 0.0
      %1010 = vmatprep.subr.mxu0 0.0
      %1011 = vmatpush1.msra.mxu0 0.0
      %1012 = vmatprep.subr.mxu0 0.0
      %1013 = vmatpush1.msra.mxu0 0.0
      %1014 = vmatprep.subr.mxu0 0.0
      %1015 = vmatpush1.msra.mxu0 0.0
      %1016 = vmatprep.subr.mxu0 0.0
      %1017 = vmatpush1.msra.mxu0 0.0
      %1018 = vmatprep.subr.mxu0 0.0
      %1019 = vmatpush1.msra.mxu0 0.0
      %1020 = vmatprep.subr.mxu0 0.0
      %1021 = vmatpush1.msra.mxu0 0.0
      %1022 = vmatprep.subr.mxu0 0.0
      %1023 = vmatpush1.msra.mxu0 0.0
      %1024 = vmatprep.subr.mxu0 0.0
      %1025 = vmatpush1.msra.mxu0 0.0
      %1026 = vmatprep.subr.mxu0 0.0
      %1027 = vmatpush1.msra.mxu0 0.0
      %1028 = vmatprep.subr.mxu0 0.0
      %1029 = vmatpush1.msra.mxu0 0.0
      %1030 = vmatprep.subr.mxu0 0.0
      %1031 = vmatpush1.msra.mxu0 0.0
      %1032 = vmatprep.subr.mxu0 0.0
      %1033 = vmatpush1.msra.mxu0 0.0
      %1034 = vmatprep.subr.mxu0 0.0
      %1035 = vmatpush1.msra.mxu0 0.0
      %1036 = vmatprep.subr.mxu0 0.0
      %1037 = vmatpush1.msra.mxu0 0.0
      %1038 = vmatprep.subr.mxu0 0.0
      %1039 = vmatpush1.msra.mxu0 0.0
      %1040 = vmatprep.subr.mxu0 0.0
      %1041 = vmatpush1.msra.mxu0 0.0
      %1042 = vmatprep.subr.mxu0 0.0
      %1043 = vmatpush1.msra.mxu0 0.0
      %1044 = vmatprep.subr.mxu0 0.0
      %1045 = vmatpush1.msra.mxu0 0.0
      %1046 = vmatprep.subr.mxu0 0.0
      %1047 = vmatpush1.msra.mxu0 0.0
      %1048 = vmatprep.subr.mxu0 0.0
      %1049 = vmatpush1.msra.mxu0 0.0
      %1050 = vmatprep.subr.mxu0 0.0
      %1051 = vmatpush1.msra.mxu0 0.0
      %1052 = vmatprep.mubr.f32.mxu0 0.0
      %1053 = vmatmul.mubr.f32.gmra.mrb[0].mxu0 %v986
      %v1054 = vpop.f32.mrb[0].mxu0
      %v1055 = vadd.f32 0.0, %v1054
      %v1056 = vpop.f32.mrb[0].mxu0
      %1057 = vdwg.mxu0
      %v1058 = vadd.f32 %v984, %v1055
      %v1059 = vxor.u32 %v1058, 2147483648
      %v1060 = vmul.f32 %v1059, 1.442695
      %v1061 = vpow.pop %v1060
      %v1062 = vadd.f32 %v1061, 1.0
      %v1063 = vrcp.pop %v1062
      %v1064 = vmul.f32 1.0, %v1063
      %v1065 = vtanh.pop %v1058
      %v1066 = vld [vmem:[#allocation3] sm:$0x3]
      %1068 = vrot.lane.b32.xlu0 %v1066, 32
      %v1069 = vpop.permute.xlu0 %1068
      %v1071 = vmul.f32 %v1064, %v1069
      %1073 = vrot.lane.b32.xlu0 %v1065, 32
      %v1074 = vpop.permute.xlu0 %1073
      %v1076 = vmul.f32 %v1064, %v1074
      %1078 = vrot.lane.b32.xlu0 %v1076, 32
      %v1079 = vpop.permute.xlu0 %1078
      %v1081 = vadd.f32 %v1071, %v1079
      %v1082 = vtanh.pop %v1081
      %1084 = vrot.lane.b32.xlu0 %v1082, 32
      %v1085 = vpop.permute.xlu0 %1084
      %v1087 = vmul.f32 %v1064, %v1085
      %1089 = vrot.lane.b32.xlu0 %v1081, 96
      %v1090 = vpop.permute.xlu0 %1089
      %1092 = vst.msk [vmem:[#allocation3] sm:$0x3] %vm189, %v1090
      %1094 = vrot.lane.b32.xlu0 %v1087, 64
      %v1095 = vpop.permute.xlu0 %1094
      %1097 = vst.msk [vmem:[#allocation2] sm:$0x3] %vm189, %v1095
      %v1098 = vld [vmem:[%s188] sm:$0x3]
      %s1099 = scalar_lea.vmem %s1, 12
      %v1100 = vld [vmem:[%s1099] sm:$0x3]
      %1102 = vset.pattern.permute.xlu0 0
      %1103 = vperm.xlu0 %1102, %v1100
      %v1104 = vpop.permute.xlu0 %1103
      %v1106 = vadd.f32 %v1087, %v1104
      %1108 = vrot.lane.b32.xlu0 %v1106, 64
      %v1109 = vpop.permute.xlu0 %1108
      %v1111 = vmax.f32 %v1098, %v1109
      %1112 = vst.msk [vmem:[%s188] sm:$0x3] %vm189, %v1111
      %v1113 = vld [vmem:[#allocation2] sm:$0x3]
      %s1114 = scalar_lea.vmem %s179, 14
      %v1115 = vld [vmem:[%s1114] sm:$0x3]
      %v1117 = vsel %vm199, %v1113, 0
      %1119 = vmatprep.subr.mxu0 0.0
      %1120 = vmatpush1.msra.mxu0 %v193
      %1121 = vmatprep.subr.mxu0 0.0
      %1122 = vmatpush1.msra.mxu0 %v194
      %1123 = vmatprep.subr.mxu0 0.0
      %1124 = vmatpush1.msra.mxu0 %v195
      %1125 = vmatprep.subr.mxu0 0.0
      %1126 = vmatpush1.msra.mxu0 %v196
      %1127 = vmatprep.subr.mxu0 0.0
      %1128 = vmatpush1.msra.mxu0 0.0
      %1129 = vmatprep.subr.mxu0 0.0
      %1130 = vmatpush1.msra.mxu0 0.0
      %1131 = vmatprep.subr.mxu0 0.0
      %1132 = vmatpush1.msra.mxu0 0.0
      %1133 = vmatprep.subr.mxu0 0.0
      %1134 = vmatpush1.msra.mxu0 0.0
      %1135 = vmatprep.subr.mxu0 0.0
      %1136 = vmatpush1.msra.mxu0 0.0
      %1137 = vmatprep.subr.mxu0 0.0
      %1138 = vmatpush1.msra.mxu0 0.0
      %1139 = vmatprep.subr.mxu0 0.0
      %1140 = vmatpush1.msra.mxu0 0.0
      %1141 = vmatprep.subr.mxu0 0.0
      %1142 = vmatpush1.msra.mxu0 0.0
      %1143 = vmatprep.subr.mxu0 0.0
      %1144 = vmatpush1.msra.mxu0 0.0
      %1145 = vmatprep.subr.mxu0 0.0
      %1146 = vmatpush1.msra.mxu0 0.0
      %1147 = vmatprep.subr.mxu0 0.0
      %1148 = vmatpush1.msra.mxu0 0.0
      %1149 = vmatprep.subr.mxu0 0.0
      %1150 = vmatpush1.msra.mxu0 0.0
      %1151 = vmatprep.subr.mxu0 0.0
      %1152 = vmatpush1.msra.mxu0 0.0
      %1153 = vmatprep.subr.mxu0 0.0
      %1154 = vmatpush1.msra.mxu0 0.0
      %1155 = vmatprep.subr.mxu0 0.0
      %1156 = vmatpush1.msra.mxu0 0.0
      %1157 = vmatprep.subr.mxu0 0.0
      %1158 = vmatpush1.msra.mxu0 0.0
      %1159 = vmatprep.subr.mxu0 0.0
      %1160 = vmatpush1.msra.mxu0 0.0
      %1161 = vmatprep.subr.mxu0 0.0
      %1162 = vmatpush1.msra.mxu0 0.0
      %1163 = vmatprep.subr.mxu0 0.0
      %1164 = vmatpush1.msra.mxu0 0.0
      %1165 = vmatprep.subr.mxu0 0.0
      %1166 = vmatpush1.msra.mxu0 0.0
      %1167 = vmatprep.subr.mxu0 0.0
      %1168 = vmatpush1.msra.mxu0 0.0
      %1169 = vmatprep.subr.mxu0 0.0
      %1170 = vmatpush1.msra.mxu0 0.0
      %1171 = vmatprep.subr.mxu0 0.0
      %1172 = vmatpush1.msra.mxu0 0.0
      %1173 = vmatprep.subr.mxu0 0.0
      %1174 = vmatpush1.msra.mxu0 0.0
      %1175 = vmatprep.subr.mxu0 0.0
      %1176 = vmatpush1.msra.mxu0 0.0
      %1177 = vmatprep.subr.mxu0 0.0
      %1178 = vmatpush1.msra.mxu0 0.0
      %1179 = vmatprep.subr.mxu0 0.0
      %1180 = vmatpush1.msra.mxu0 0.0
      %1181 = vmatprep.subr.mxu0 0.0
      %1182 = vmatpush1.msra.mxu0 0.0
      %1183 = vmatprep.mubr.f32.mxu0 0.0
      %1184 = vmatmul.mubr.f32.gmra.mrb[0].mxu0 %v1117
      %v1185 = vpop.f32.mrb[0].mxu0
      %v1186 = vadd.f32 0.0, %v1185
      %v1187 = vpop.f32.mrb[0].mxu0
      %1188 = vdwg.mxu0
      %v1189 = vadd.f32 %v1115, %v1186
      %v1190 = vxor.u32 %v1189, 2147483648
      %v1191 = vmul.f32 %v1190, 1.442695
      %v1192 = vpow.pop %v1191
      %v1193 = vadd.f32 %v1192, 1.0
      %v1194 = vrcp.pop %v1193
      %v1195 = vmul.f32 1.0, %v1194
      %v1196 = vtanh.pop %v1189
      %v1197 = vld [vmem:[#allocation3] sm:$0x3]
      %1199 = vrot.lane.b32.xlu0 %v1197, 32
      %v1200 = vpop.permute.xlu0 %1199
      %v1202 = vmul.f32 %v1195, %v1200
      %1204 = vrot.lane.b32.xlu0 %v1196, 32
      %v1205 = vpop.permute.xlu0 %1204
      %v1207 = vmul.f32 %v1195, %v1205
      %1209 = vrot.lane.b32.xlu0 %v1207, 32
      %v1210 = vpop.permute.xlu0 %1209
      %v1212 = vadd.f32 %v1202, %v1210
      %v1213 = vtanh.pop %v1212
      %1215 = vrot.lane.b32.xlu0 %v1213, 32
      %v1216 = vpop.permute.xlu0 %1215
      %v1218 = vmul.f32 %v1195, %v1216
      %1220 = vrot.lane.b32.xlu0 %v1212, 96
      %v1221 = vpop.permute.xlu0 %1220
      %1223 = vst.msk [vmem:[#allocation3] sm:$0x3] %vm189, %v1221
      %1225 = vrot.lane.b32.xlu0 %v1218, 64
      %v1226 = vpop.permute.xlu0 %1225
      %1228 = vst.msk [vmem:[#allocation2] sm:$0x3] %vm189, %v1226
      %v1229 = vld [vmem:[%s188] sm:$0x3]
      %s1230 = scalar_lea.vmem %s1, 14
      %v1231 = vld [vmem:[%s1230] sm:$0x3]
      %1233 = vset.pattern.permute.xlu0 0
      %1234 = vperm.xlu0 %1233, %v1231
      %v1235 = vpop.permute.xlu0 %1234
      %v1237 = vadd.f32 %v1218, %v1235
      %1239 = vrot.lane.b32.xlu0 %v1237, 64
      %v1240 = vpop.permute.xlu0 %1239
      %v1242 = vmax.f32 %v1229, %v1240
      %1243 = vst.msk [vmem:[%s188] sm:$0x3] %vm189, %v1242
      %p1244 = scmp.lt.s32.totalorder %s14, 1
      %s1245 = scalar_select %p1244, %s14, 1
      %s1246 = smul.addr %s1245, 2
      %s1247 = scalar_lea.vmem %s3, %s1246
      // Predicated region
      $region33: #{bilstm_forward.1} parent=31 // pred_check
        %p1248 = pneg %p105
      $region34: #{bilstm_forward.1} parent=31 // pred_check_branch
        %1250 = sbr.rel (%p1248) target = $region36
      $region35: #{bilstm_forward.1} parent=31 // pred_region
        _
      $region36: #{bilstm_forward.1} parent=31 // pred_fallthru
        _
    $region32: #{bilstm_forward.1} parent=5 // pred_fallthru
      _
    %p1251 = scmp.le.s32.totalorder 2, %s9
    // Predicated region
    $region37: #{bilstm_forward.1} parent=5 // pred_check
      %p1252 = pneg %p1251
    $region38: #{bilstm_forward.1} parent=5 // pred_check_branch
      %1254 = sbr.rel (%p1252) target = $region40
    $region39: #{bilstm_forward.1} parent=5 // pred_region
      %s1255 = ssub.s32 %s9, 2
      // Predicated region
      $region41: #{bilstm_forward.1} parent=39 // pred_check
        %p1256 = pneg %p111
      $region42: #{bilstm_forward.1} parent=39 // pred_check_branch
        %1258 = sbr.rel (%p1256) target = $region44
      $region43: #{bilstm_forward.1} parent=39 // pred_region
        %p1259 = scmp.lt.s32.totalorder %s15, 1
        %s1260 = scalar_select %p1259, %s15, 1
        %s1261 = smul.addr %s1260, 2
        %s1262 = scalar_lea.vmem %s3, %s1261
      $region44: #{bilstm_forward.1} parent=39 // pred_fallthru
        _
    $region40: #{bilstm_forward.1} parent=5 // pred_fallthru
      _
  $region6: #{bilstm_forward.1} parent=0 // loop_footer
    %s13 = sadd.s32 1, %s9
  $region7: #{bilstm_forward.1} parent=0 // loop_footer_branch
    %8 = sbr.rel target = $region3
  $region8: #{bilstm_forward.1} parent=0 // loop_exit
    _

</llo_original>
